<compile_context>
chip_gen: v6e
topology: v6e:2x2x1
jax: 0.10.0
libtpu: 0.0.40
codegen_flags: <defaults>
</compile_context>

<pallas_src>
import functools

import jax
import jax.numpy as jnp
from jax import lax
from jax.experimental import pallas as pl
from jax.experimental.pallas import tpu as pltpu

LANE = 128


def _round_up(x, m):
    return ((x + m - 1) // m) * m


# ----------------------------------------------------------------------------
# Pallas kernel: one (batch, row-tile) step.
# Computes relu(conv3(relu(conv2(relu(conv1(x))))) + x) with BN folded.
# ----------------------------------------------------------------------------
def bottleneck_kernel(x_ref, w1_ref, b1_ref, w2_ref, b2_ref, w3_ref, b3_ref,
                      o_ref, *, tile_rows):
    # x_ref : (1, H+2, W, Cp) halo-padded image, resident per batch element
    # o_ref : (1, tile_rows, W, Cp) output row tile
    _, _, W, Cp = x_ref.shape
    th = tile_rows
    M = th * W                  # flattened output rows per tile
    Mw = (th + 2) * W           # flattened window rows (1-row halo each side)
    cdt = w2_ref.dtype          # MXU operand dtype (bf16 on the perf path)

    ti = pl.program_id(1)
    nt = pl.num_programs(1)
    row0 = pl.multiple_of(ti * th, th)

    # (tile_rows + 2)-row halo window of the padded image, flattened to 2-D.
    xwin = x_ref[0, pl.ds(row0, th + 2), :, :]            # [th+2, W, Cp]
    xflat = xwin.reshape(Mw, Cp)                          # lane-dense slab

    # ---- conv1 (1x1, BN folded) + bias + relu (f32) -------------------------
    r1 = jnp.dot(xflat, w1_ref[...], preferred_element_type=jnp.float32)
    r1 = jnp.maximum(r1 + b1_ref[...], 0.0)               # [Mw, Cp]

    # Zero the rows of r1 corresponding to the image's zero halo rows (top row
    # of the first tile, bottom row of the last tile): the reference zero-pads
    # the POST-relu activation for the 3x3 conv, so those rows must feed zeros
    # (not relu(b1_folded)) into conv2.
    fidx = lax.broadcasted_iota(jnp.int32, (Mw, 1), 0)    # flattened row idx
    lo = jnp.where(ti == 0, W, 0)                         # rows < lo zeroed
    hi = jnp.where(ti == nt - 1, Mw - W, Mw)              # rows >= hi zeroed
    keep = jnp.logical_and(fidx >= lo, fidx < hi)
    r1 = jnp.where(keep, r1, 0.0)

    # Column index of each flattened row (for the horizontal zero-pad masks).
    if W & (W - 1) == 0:
        col = jnp.bitwise_and(fidx, W - 1)
    else:
        col = lax.rem(fidx, W)
    is_col0 = col == 0
    is_colW = col == (W - 1)

    # ---- conv2 (3x3, stride 1, pad 1) + bias + relu -------------------------
    # dx shift: pltpu.roll of the flattened slab (XLU) + column mask (the rows
    # that wrapped across the W boundary are exactly the ones a padded conv
    # reads as zero).  dy shift: tile-aligned static row slices.  The 9 taps
    # are 9 MXU matmuls accumulated in a local value (no VMEM round trips).
    acc = None
    for dx in range(3):
        if dx == 0:        # left neighbour
            s = jnp.where(is_col0, 0.0, pltpu.roll(r1, shift=1, axis=0))
        elif dx == 1:      # centre
            s = r1
        else:              # right neighbour
            s = jnp.where(is_colW, 0.0, pltpu.roll(r1, shift=Mw - 1, axis=0))
        s = s.astype(cdt)
        for dy in range(3):
            part = jnp.dot(s[dy * W: dy * W + M], w2_ref[3 * dy + dx],
                           preferred_element_type=jnp.float32)
            acc = part if acc is None else acc + part
    r2 = jnp.maximum(acc + b2_ref[...], 0.0)               # [M, Cp]

    # ---- conv3 (1x1) + bias, identity shortcut, relu ------------------------
    r3 = jnp.dot(r2.astype(cdt), w3_ref[...],
                 preferred_element_type=jnp.float32)
    skip = xflat[W:W + M].astype(jnp.float32)              # centre rows of x
    out = jnp.maximum(r3 + b3_ref[...] + skip, 0.0)
    o_ref[...] = out.reshape(1, th, W, Cp).astype(o_ref.dtype)


# ----------------------------------------------------------------------------
# Wrapper: torch-layout params -> folded/padded kernel params, NCHW <-> NHWC.
# ----------------------------------------------------------------------------
def _fold_bn(conv_w, bn, eps):
    gamma, beta, mean, var = bn
    s = gamma / jnp.sqrt(var + eps)       # per output channel
    return conv_w * s, beta - mean * s    # scale folds onto the last (out) axis


def _prep_params(params, Cp, compute_dtype):
    eps = params["eps"]
    P = params["w1"].shape[0]

    # 1x1 convs [O, I, 1, 1] -> [I, O];  3x3 conv [O, I, 3, 3] -> [3*dy+dx, I, O]
    w1 = jnp.transpose(params["w1"][:, :, 0, 0], (1, 0))
    w3 = jnp.transpose(params["w3"][:, :, 0, 0], (1, 0))
    w2 = jnp.transpose(params["w2"], (2, 3, 1, 0)).reshape(9, P, P)

    w1, b1 = _fold_bn(w1, params["bn1"], eps)
    w2, b2 = _fold_bn(w2, params["bn2"], eps)
    w3, b3 = _fold_bn(w3, params["bn3"], eps)

    def pad2(w):
        w = jnp.pad(w, ((0, Cp - w.shape[0]), (0, Cp - w.shape[1])))
        return w.astype(compute_dtype)

    def padb(b):
        return jnp.pad(b, (0, Cp - b.shape[0])).reshape(1, Cp).astype(jnp.float32)

    w2 = jnp.pad(w2, ((0, 0), (0, Cp - P), (0, Cp - P))).astype(compute_dtype)
    return dict(w1=pad2(w1), b1=padb(b1), w2=w2, b2=padb(b2),
                w3=pad2(w3), b3=padb(b3))


def _vmem_limit_bytes():
    # Generation-aware scoped-VMEM limit: ~75% of physical, capped at 96 MiB
    # (v5e/v6e have 128 MiB, v7x has 64 MiB per core).
    try:
        cap = int(pltpu.get_tpu_info().vmem_capacity_bytes)
    except Exception:
        cap = 64 * 1024 * 1024
    return max(min(cap * 3 // 4, 96 * 1024 * 1024), 32 * 1024 * 1024)


def _pick_tile_rows(H, W, Cp, compute_bytes, budget_bytes):
    # Largest divisor of H whose per-tile intermediates fit the budget
    # (amortizes per-grid-step overhead and the 2-halo-row conv1 recompute).
    best = 1
    for t in range(1, H + 1):
        if H % t:
            continue
        win = (t + 2) * W * Cp
        out = t * W * Cp
        # r1 + one shifted slab (f32) + x window copy, plus acc/r2/r3 and the
        # double-buffered f32 output block.
        interm = win * (4 + 4 + compute_bytes) + out * (3 * 4 + 2 * 4)
        if interm <= budget_bytes:
            best = t
    return best


@functools.partial(jax.jit, static_argnames=("tile_rows", "compute_dtype"))
def bottleneck_forward(x_nchw, params, tile_rows=None,
                       compute_dtype=jnp.bfloat16):
    """Inference forward of the PyTorch Bottleneck (stride == 1 path)."""
    N, Cin, H, W = x_nchw.shape
    P = params["w1"].shape[0]
    assert Cin == P, "identity-shortcut path requires inplanes == planes"
    assert W % 8 == 0, "W must be a multiple of 8 (sublane-aligned dy slices)"

    Cp = _round_up(max(Cin, P), LANE)     # lane-dense channel width
    cbytes = jnp.dtype(compute_dtype).itemsize

    vmem_limit = _vmem_limit_bytes()
    if tile_rows is None:
        tile_rows = _pick_tile_rows(H, W, Cp, cbytes,
                                    budget_bytes=vmem_limit // 3)
    assert H % tile_rows == 0
    n_tiles = H // tile_rows

    kp = _prep_params(params, Cp, compute_dtype)

    # NCHW -> NHWC (cast to the compute dtype: bf16 halves HBM->VMEM DMA),
    # pad channels to lane width and H by one zero halo row top & bottom.
    # NOTE: at realistic channel counts (>=128) the channel pad is a no-op.
    x = jnp.transpose(x_nchw, (0, 2, 3, 1)).astype(compute_dtype)
    x = jnp.pad(x, ((0, 0), (1, 1), (0, 0), (0, Cp - Cin)))

    out = pl.pallas_call(
        functools.partial(bottleneck_kernel, tile_rows=tile_rows),
        out_shape=jax.ShapeDtypeStruct((N, H, W, Cp), x_nchw.dtype),
        grid=(N, n_tiles),
        in_specs=[
            # padded image: resident across the row-tile axis (constant idx)
            pl.BlockSpec((1, H + 2, W, Cp), lambda b, i: (b, 0, 0, 0)),
            pl.BlockSpec((Cp, Cp), lambda b, i: (0, 0)),
            pl.BlockSpec((1, Cp), lambda b, i: (0, 0)),
            pl.BlockSpec((9, Cp, Cp), lambda b, i: (0, 0, 0)),
            pl.BlockSpec((1, Cp), lambda b, i: (0, 0)),
            pl.BlockSpec((Cp, Cp), lambda b, i: (0, 0)),
            pl.BlockSpec((1, Cp), lambda b, i: (0, 0)),
        ],
        out_specs=pl.BlockSpec((1, tile_rows, W, Cp),
                               lambda b, i: (b, i, 0, 0)),
        compiler_params=pltpu.CompilerParams(
            # batch axis parallel only: prevents both v7x cores from each
            # re-fetching the whole resident image for different row tiles.
            dimension_semantics=("parallel", "arbitrary"),
            vmem_limit_bytes=vmem_limit),
    )(x, kp["w1"], kp["b1"], kp["w2"], kp["b2"], kp["w3"], kp["b3"])

    # drop channel padding, back to NCHW
    return jnp.transpose(out[:, :, :, :P], (0, 3, 1, 2))


# ----------------------------------------------------------------------------
# Deterministic parameters + pure-JAX NCHW reference for verification.
# ----------------------------------------------------------------------------
def make_params(key, inplanes, planes):
    ks = jax.random.split(key, 12)
    eps = 1e-5

    def bn(kg, kb, km, kv, c):
        gamma = 1.0 + 0.1 * jax.random.normal(kg, (c,), jnp.float32)
        beta = 0.1 * jax.random.normal(kb, (c,), jnp.float32)
        mean = 0.1 * jax.random.normal(km, (c,), jnp.float32)
        var = 0.5 + jnp.abs(jax.random.normal(kv, (c,), jnp.float32))
        return gamma, beta, mean, var

    return dict(
        w1=0.2 * jax.random.normal(ks[0], (planes, inplanes, 1, 1), jnp.float32),
        w2=0.2 * jax.random.normal(ks[1], (planes, planes, 3, 3), jnp.float32),
        w3=0.2 * jax.random.normal(ks[2], (planes, planes, 1, 1), jnp.float32),
        bn1=bn(ks[3], ks[4], ks[5], ks[6], planes),
        bn2=bn(ks[7], ks[8], ks[9], ks[10], planes),
        bn3=bn(ks[11], ks[3], ks[7], ks[0], planes),   # deterministic reuse ok
        eps=eps)


def bottleneck_ref_nchw(x, p):
    dn = ("NCHW", "OIHW", "NCHW")

    def conv(x, w, pad):
        return lax.conv_general_dilated(x, w, (1, 1), pad,
                                        dimension_numbers=dn,
                                        precision=lax.Precision.HIGHEST)

    def bnorm(x, stats):
        g, b, m, v = stats
        rs = (1, -1, 1, 1)
        return (x - m.reshape(rs)) / jnp.sqrt(v.reshape(rs) + p["eps"]) \
            * g.reshape(rs) + b.reshape(rs)

    r = jax.nn.relu(bnorm(conv(x, p["w1"], "VALID"), p["bn1"]))
    r = jax.nn.relu(bnorm(conv(r, p["w2"], [(1, 1), (1, 1)]), p["bn2"]))
    r = bnorm(conv(r, p["w3"], "VALID"), p["bn3"])
    return jax.nn.relu(r + x)


if __name__ == "__main__":
    N, C, H, W = 2, 4, 16, 16      # inplanes == planes == 4, stride == 1
    key = jax.random.PRNGKey(0)
    kx, kparam = jax.random.split(key)
    x = jax.random.normal(kx, (N, C, H, W), jnp.float32)
    params = make_params(kparam, C, C)

    ref = jax.block_until_ready(bottleneck_ref_nchw(x, params))

    # f32 path, several row tiles (exercises interior + edge halo masking).
    out_f32_tiled = jax.block_until_ready(
        bottleneck_forward(x, params, tile_rows=4, compute_dtype=jnp.float32))
    # f32 path, auto-picked (largest) tile -> single whole-image tile.
    out_f32_auto = jax.block_until_ready(
        bottleneck_forward(x, params, compute_dtype=jnp.float32))
    # bf16 operand path (default performance configuration).
    out_bf16 = jax.block_until_ready(bottleneck_forward(x, params))

    assert out_f32_tiled.shape == (N, C, H, W)
    e_tiled = float(jnp.max(jnp.abs(out_f32_tiled - ref)))
    e_auto = float(jnp.max(jnp.abs(out_f32_auto - ref)))
    e_bf16 = float(jnp.max(jnp.abs(out_bf16 - ref)))
    assert e_tiled < 5e-3, f"f32 tiled mismatch, max abs err={e_tiled}"
    assert e_auto < 5e-3, f"f32 auto mismatch, max abs err={e_auto}"
    assert e_bf16 < 2e-1, f"bf16 mismatch, max abs err={e_bf16}"
    print("KERNEL_OK")
</pallas_src>

<mosaic_0001>
module attributes {stable_mosaic.version = 11 : i64} {
  func.func @bottleneck_kernel(%arg0: i32, %arg1: i32, %arg2: memref<1x18x16x128xf32, #tpu.memory_space<vmem>>, %arg3: memref<128x128xf32, #tpu.memory_space<vmem>>, %arg4: memref<1x128xf32, #tpu.memory_space<vmem>>, %arg5: memref<9x128x128xf32, #tpu.memory_space<vmem>>, %arg6: memref<1x128xf32, #tpu.memory_space<vmem>>, %arg7: memref<128x128xf32, #tpu.memory_space<vmem>>, %arg8: memref<1x128xf32, #tpu.memory_space<vmem>>, %arg9: memref<1x4x16x128xf32, #tpu.memory_space<vmem>>) attributes {dimension_semantics = [#tpu.dimension_semantics<parallel>, #tpu.dimension_semantics<arbitrary>], iteration_bounds = array<i64: 2, 4>, scalar_prefetch = 0 : i64, scratch_operands = 0 : i64, tpu.core_type = #tpu.core_type<tc>, window_params = [{transform_indices = @transform_0, window_bounds = array<i64: 1, 18, 16, 128>}, {pipeline_mode = #tpu.pipeline_mode<synchronous>, transform_indices = @transform_1, window_bounds = array<i64: 128, 128>}, {pipeline_mode = #tpu.pipeline_mode<synchronous>, transform_indices = @transform_2, window_bounds = array<i64: 1, 128>}, {pipeline_mode = #tpu.pipeline_mode<synchronous>, transform_indices = @transform_3, window_bounds = array<i64: 9, 128, 128>}, {pipeline_mode = #tpu.pipeline_mode<synchronous>, transform_indices = @transform_4, window_bounds = array<i64: 1, 128>}, {pipeline_mode = #tpu.pipeline_mode<synchronous>, transform_indices = @transform_5, window_bounds = array<i64: 128, 128>}, {pipeline_mode = #tpu.pipeline_mode<synchronous>, transform_indices = @transform_6, window_bounds = array<i64: 1, 128>}, {transform_indices = @transform_7, window_bounds = array<i64: 1, 4, 16, 128>}]} {
    %c4_i32 = arith.constant 4 : i32
    %0 = arith.muli %arg1, %c4_i32 : i32
    %1 = tpu.assume_multiple %0, 4 : i32
    %c0 = arith.constant 0 : index
    %2 = arith.index_cast %1 : i32 to index
    %c0_0 = arith.constant 0 : index
    %c0_1 = arith.constant 0 : index
    %3 = vector.load %arg2[%c0, %2, %c0_0, %c0_1] : memref<1x18x16x128xf32, #tpu.memory_space<vmem>>, vector<1x6x16x128xf32>
    %4 = vector.shape_cast %3 : vector<1x6x16x128xf32> to vector<6x16x128xf32>
    %5 = vector.shape_cast %4 : vector<6x16x128xf32> to vector<96x128xf32>
    %c0_2 = arith.constant 0 : index
    %c0_3 = arith.constant 0 : index
    %6 = vector.load %arg3[%c0_2, %c0_3] : memref<128x128xf32, #tpu.memory_space<vmem>>, vector<128x128xf32>
    %cst = arith.constant dense<0.000000e+00> : vector<96x128xf32>
    %7 = tpu.matmul %5, %6, %cst {dimension_numbers = #tpu.dot_dimension_numbers<[1], [0], [0], [1], [0, 0, 1, 1], [], []>} : vector<96x128xf32>, vector<128x128xf32>, vector<96x128xf32> -> vector<96x128xf32>
    %c0_4 = arith.constant 0 : index
    %c0_5 = arith.constant 0 : index
    %8 = vector.load %arg4[%c0_4, %c0_5] : memref<1x128xf32, #tpu.memory_space<vmem>>, vector<1x128xf32>
    %9 = vector.broadcast %8 : vector<1x128xf32> to vector<96x128xf32>
    %10 = arith.addf %7, %9 : vector<96x128xf32>
    %cst_6 = arith.constant 0.000000e+00 : f32
    %11 = vector.broadcast %cst_6 : f32 to vector<96x128xf32>
    %12 = arith.maximumf %10, %11 : vector<96x128xf32>
    %13 = tpu.iota {dimensions = array<i32: 0>} : vector<96x1xi32>
    %c0_i32 = arith.constant 0 : i32
    %14 = arith.cmpi eq, %arg1, %c0_i32 : i32
    %c16_i32 = arith.constant 16 : i32
    %c0_i32_7 = arith.constant 0 : i32
    %15 = arith.select %14, %c16_i32, %c0_i32_7 : i32
    %c3_i32 = arith.constant 3 : i32
    %16 = arith.cmpi eq, %arg1, %c3_i32 : i32
    %c80_i32 = arith.constant 80 : i32
    %c96_i32 = arith.constant 96 : i32
    %17 = arith.select %16, %c80_i32, %c96_i32 : i32
    %18 = vector.broadcast %15 : i32 to vector<96x1xi32>
    %19 = arith.cmpi sge, %13, %18 : vector<96x1xi32>
    %20 = vector.broadcast %17 : i32 to vector<96x1xi32>
    %21 = arith.cmpi slt, %13, %20 : vector<96x1xi32>
    %22 = arith.andi %19, %21 : vector<96x1xi1>
    %cst_8 = arith.constant 0.000000e+00 : f32
    %23 = vector.shape_cast %22 : vector<96x1xi1> to vector<96x1xi1>
    %24 = vector.broadcast %23 : vector<96x1xi1> to vector<96x128xi1>
    %25 = vector.broadcast %cst_8 : f32 to vector<96x128xf32>
    %26 = arith.select %24, %12, %25 : vector<96x128xi1>, vector<96x128xf32>
    %c15_i32 = arith.constant 15 : i32
    %27 = vector.broadcast %c15_i32 : i32 to vector<96x1xi32>
    %28 = arith.andi %13, %27 : vector<96x1xi32>
    %c0_i32_9 = arith.constant 0 : i32
    %29 = vector.broadcast %c0_i32_9 : i32 to vector<96x1xi32>
    %30 = arith.cmpi eq, %28, %29 : vector<96x1xi32>
    %c15_i32_10 = arith.constant 15 : i32
    %31 = vector.broadcast %c15_i32_10 : i32 to vector<96x1xi32>
    %32 = arith.cmpi eq, %28, %31 : vector<96x1xi32>
    %c1_i32 = arith.constant 1 : i32
    %33 = tpu.dynamic_rotate %26 by %c1_i32 dim 0 : vector<96x128xf32>, i32 -> vector<96x128xf32>
    %cst_11 = arith.constant 0.000000e+00 : f32
    %34 = vector.shape_cast %30 : vector<96x1xi1> to vector<96x1xi1>
    %35 = vector.broadcast %34 : vector<96x1xi1> to vector<96x128xi1>
    %36 = vector.broadcast %cst_11 : f32 to vector<96x128xf32>
    %37 = arith.select %35, %36, %33 : vector<96x128xi1>, vector<96x128xf32>
    %38 = vector.extract_strided_slice %37 {offsets = [0, 0], sizes = [64, 128], strides = [1, 1]} : vector<96x128xf32> to vector<64x128xf32>
    %c0_12 = arith.constant 0 : index
    %c0_13 = arith.constant 0 : index
    %c0_14 = arith.constant 0 : index
    %39 = vector.load %arg5[%c0_12, %c0_13, %c0_14] : memref<9x128x128xf32, #tpu.memory_space<vmem>>, vector<1x128x128xf32>
    %40 = vector.shape_cast %39 : vector<1x128x128xf32> to vector<128x128xf32>
    %cst_15 = arith.constant dense<0.000000e+00> : vector<64x128xf32>
    %41 = tpu.matmul %38, %40, %cst_15 {dimension_numbers = #tpu.dot_dimension_numbers<[1], [0], [0], [1], [0, 0, 1, 1], [], []>} : vector<64x128xf32>, vector<128x128xf32>, vector<64x128xf32> -> vector<64x128xf32>
    %42 = vector.extract_strided_slice %37 {offsets = [16, 0], sizes = [64, 128], strides = [1, 1]} : vector<96x128xf32> to vector<64x128xf32>
    %c3 = arith.constant 3 : index
    %c0_16 = arith.constant 0 : index
    %c0_17 = arith.constant 0 : index
    %43 = vector.load %arg5[%c3, %c0_16, %c0_17] : memref<9x128x128xf32, #tpu.memory_space<vmem>>, vector<1x128x128xf32>
    %44 = vector.shape_cast %43 : vector<1x128x128xf32> to vector<128x128xf32>
    %cst_18 = arith.constant dense<0.000000e+00> : vector<64x128xf32>
    %45 = tpu.matmul %42, %44, %cst_18 {dimension_numbers = #tpu.dot_dimension_numbers<[1], [0], [0], [1], [0, 0, 1, 1], [], []>} : vector<64x128xf32>, vector<128x128xf32>, vector<64x128xf32> -> vector<64x128xf32>
    %46 = arith.addf %41, %45 : vector<64x128xf32>
    %47 = vector.extract_strided_slice %37 {offsets = [32, 0], sizes = [64, 128], strides = [1, 1]} : vector<96x128xf32> to vector<64x128xf32>
    %c6 = arith.constant 6 : index
    %c0_19 = arith.constant 0 : index
    %c0_20 = arith.constant 0 : index
    %48 = vector.load %arg5[%c6, %c0_19, %c0_20] : memref<9x128x128xf32, #tpu.memory_space<vmem>>, vector<1x128x128xf32>
    %49 = vector.shape_cast %48 : vector<1x128x128xf32> to vector<128x128xf32>
    %cst_21 = arith.constant dense<0.000000e+00> : vector<64x128xf32>
    %50 = tpu.matmul %47, %49, %cst_21 {dimension_numbers = #tpu.dot_dimension_numbers<[1], [0], [0], [1], [0, 0, 1, 1], [], []>} : vector<64x128xf32>, vector<128x128xf32>, vector<64x128xf32> -> vector<64x128xf32>
    %51 = arith.addf %46, %50 : vector<64x128xf32>
    %52 = vector.extract_strided_slice %26 {offsets = [0, 0], sizes = [64, 128], strides = [1, 1]} : vector<96x128xf32> to vector<64x128xf32>
    %c1 = arith.constant 1 : index
    %c0_22 = arith.constant 0 : index
    %c0_23 = arith.constant 0 : index
    %53 = vector.load %arg5[%c1, %c0_22, %c0_23] : memref<9x128x128xf32, #tpu.memory_space<vmem>>, vector<1x128x128xf32>
    %54 = vector.shape_cast %53 : vector<1x128x128xf32> to vector<128x128xf32>
    %cst_24 = arith.constant dense<0.000000e+00> : vector<64x128xf32>
    %55 = tpu.matmul %52, %54, %cst_24 {dimension_numbers = #tpu.dot_dimension_numbers<[1], [0], [0], [1], [0, 0, 1, 1], [], []>} : vector<64x128xf32>, vector<128x128xf32>, vector<64x128xf32> -> vector<64x128xf32>
    %56 = arith.addf %51, %55 : vector<64x128xf32>
    %57 = vector.extract_strided_slice %26 {offsets = [16, 0], sizes = [64, 128], strides = [1, 1]} : vector<96x128xf32> to vector<64x128xf32>
    %c4 = arith.constant 4 : index
    %c0_25 = arith.constant 0 : index
    %c0_26 = arith.constant 0 : index
    %58 = vector.load %arg5[%c4, %c0_25, %c0_26] : memref<9x128x128xf32, #tpu.memory_space<vmem>>, vector<1x128x128xf32>
    %59 = vector.shape_cast %58 : vector<1x128x128xf32> to vector<128x128xf32>
    %cst_27 = arith.constant dense<0.000000e+00> : vector<64x128xf32>
    %60 = tpu.matmul %57, %59, %cst_27 {dimension_numbers = #tpu.dot_dimension_numbers<[1], [0], [0], [1], [0, 0, 1, 1], [], []>} : vector<64x128xf32>, vector<128x128xf32>, vector<64x128xf32> -> vector<64x128xf32>
    %61 = arith.addf %56, %60 : vector<64x128xf32>
    %62 = vector.extract_strided_slice %26 {offsets = [32, 0], sizes = [64, 128], strides = [1, 1]} : vector<96x128xf32> to vector<64x128xf32>
    %c7 = arith.constant 7 : index
    %c0_28 = arith.constant 0 : index
    %c0_29 = arith.constant 0 : index
    %63 = vector.load %arg5[%c7, %c0_28, %c0_29] : memref<9x128x128xf32, #tpu.memory_space<vmem>>, vector<1x128x128xf32>
    %64 = vector.shape_cast %63 : vector<1x128x128xf32> to vector<128x128xf32>
    %cst_30 = arith.constant dense<0.000000e+00> : vector<64x128xf32>
    %65 = tpu.matmul %62, %64, %cst_30 {dimension_numbers = #tpu.dot_dimension_numbers<[1], [0], [0], [1], [0, 0, 1, 1], [], []>} : vector<64x128xf32>, vector<128x128xf32>, vector<64x128xf32> -> vector<64x128xf32>
    %66 = arith.addf %61, %65 : vector<64x128xf32>
    %c95_i32 = arith.constant 95 : i32
    %67 = tpu.dynamic_rotate %26 by %c95_i32 dim 0 : vector<96x128xf32>, i32 -> vector<96x128xf32>
    %cst_31 = arith.constant 0.000000e+00 : f32
    %68 = vector.shape_cast %32 : vector<96x1xi1> to vector<96x1xi1>
    %69 = vector.broadcast %68 : vector<96x1xi1> to vector<96x128xi1>
    %70 = vector.broadcast %cst_31 : f32 to vector<96x128xf32>
    %71 = arith.select %69, %70, %67 : vector<96x128xi1>, vector<96x128xf32>
    %72 = vector.extract_strided_slice %71 {offsets = [0, 0], sizes = [64, 128], strides = [1, 1]} : vector<96x128xf32> to vector<64x128xf32>
    %c2 = arith.constant 2 : index
    %c0_32 = arith.constant 0 : index
    %c0_33 = arith.constant 0 : index
    %73 = vector.load %arg5[%c2, %c0_32, %c0_33] : memref<9x128x128xf32, #tpu.memory_space<vmem>>, vector<1x128x128xf32>
    %74 = vector.shape_cast %73 : vector<1x128x128xf32> to vector<128x128xf32>
    %cst_34 = arith.constant dense<0.000000e+00> : vector<64x128xf32>
    %75 = tpu.matmul %72, %74, %cst_34 {dimension_numbers = #tpu.dot_dimension_numbers<[1], [0], [0], [1], [0, 0, 1, 1], [], []>} : vector<64x128xf32>, vector<128x128xf32>, vector<64x128xf32> -> vector<64x128xf32>
    %76 = arith.addf %66, %75 : vector<64x128xf32>
    %77 = vector.extract_strided_slice %71 {offsets = [16, 0], sizes = [64, 128], strides = [1, 1]} : vector<96x128xf32> to vector<64x128xf32>
    %c5 = arith.constant 5 : index
    %c0_35 = arith.constant 0 : index
    %c0_36 = arith.constant 0 : index
    %78 = vector.load %arg5[%c5, %c0_35, %c0_36] : memref<9x128x128xf32, #tpu.memory_space<vmem>>, vector<1x128x128xf32>
    %79 = vector.shape_cast %78 : vector<1x128x128xf32> to vector<128x128xf32>
    %cst_37 = arith.constant dense<0.000000e+00> : vector<64x128xf32>
    %80 = tpu.matmul %77, %79, %cst_37 {dimension_numbers = #tpu.dot_dimension_numbers<[1], [0], [0], [1], [0, 0, 1, 1], [], []>} : vector<64x128xf32>, vector<128x128xf32>, vector<64x128xf32> -> vector<64x128xf32>
    %81 = arith.addf %76, %80 : vector<64x128xf32>
    %82 = vector.extract_strided_slice %71 {offsets = [32, 0], sizes = [64, 128], strides = [1, 1]} : vector<96x128xf32> to vector<64x128xf32>
    %c8 = arith.constant 8 : index
    %c0_38 = arith.constant 0 : index
    %c0_39 = arith.constant 0 : index
    %83 = vector.load %arg5[%c8, %c0_38, %c0_39] : memref<9x128x128xf32, #tpu.memory_space<vmem>>, vector<1x128x128xf32>
    %84 = vector.shape_cast %83 : vector<1x128x128xf32> to vector<128x128xf32>
    %cst_40 = arith.constant dense<0.000000e+00> : vector<64x128xf32>
    %85 = tpu.matmul %82, %84, %cst_40 {dimension_numbers = #tpu.dot_dimension_numbers<[1], [0], [0], [1], [0, 0, 1, 1], [], []>} : vector<64x128xf32>, vector<128x128xf32>, vector<64x128xf32> -> vector<64x128xf32>
    %86 = arith.addf %81, %85 : vector<64x128xf32>
    %c0_41 = arith.constant 0 : index
    %c0_42 = arith.constant 0 : index
    %87 = vector.load %arg6[%c0_41, %c0_42] : memref<1x128xf32, #tpu.memory_space<vmem>>, vector<1x128xf32>
    %88 = vector.broadcast %87 : vector<1x128xf32> to vector<64x128xf32>
    %89 = arith.addf %86, %88 : vector<64x128xf32>
    %cst_43 = arith.constant 0.000000e+00 : f32
    %90 = vector.broadcast %cst_43 : f32 to vector<64x128xf32>
    %91 = arith.maximumf %89, %90 : vector<64x128xf32>
    %c0_44 = arith.constant 0 : index
    %c0_45 = arith.constant 0 : index
    %92 = vector.load %arg7[%c0_44, %c0_45] : memref<128x128xf32, #tpu.memory_space<vmem>>, vector<128x128xf32>
    %cst_46 = arith.constant dense<0.000000e+00> : vector<64x128xf32>
    %93 = tpu.matmul %91, %92, %cst_46 {dimension_numbers = #tpu.dot_dimension_numbers<[1], [0], [0], [1], [0, 0, 1, 1], [], []>} : vector<64x128xf32>, vector<128x128xf32>, vector<64x128xf32> -> vector<64x128xf32>
    %94 = vector.extract_strided_slice %5 {offsets = [16, 0], sizes = [64, 128], strides = [1, 1]} : vector<96x128xf32> to vector<64x128xf32>
    %c0_47 = arith.constant 0 : index
    %c0_48 = arith.constant 0 : index
    %95 = vector.load %arg8[%c0_47, %c0_48] : memref<1x128xf32, #tpu.memory_space<vmem>>, vector<1x128xf32>
    %96 = vector.broadcast %95 : vector<1x128xf32> to vector<64x128xf32>
    %97 = arith.addf %93, %96 : vector<64x128xf32>
    %98 = arith.addf %97, %94 : vector<64x128xf32>
    %cst_49 = arith.constant 0.000000e+00 : f32
    %99 = vector.broadcast %cst_49 : f32 to vector<64x128xf32>
    %100 = arith.maximumf %98, %99 : vector<64x128xf32>
    %101 = vector.shape_cast %100 : vector<64x128xf32> to vector<1x4x16x128xf32>
    %c0_50 = arith.constant 0 : index
    %c0_51 = arith.constant 0 : index
    %c0_52 = arith.constant 0 : index
    %c0_53 = arith.constant 0 : index
    %102 = vector.load %arg9[%c0_50, %c0_51, %c0_52, %c0_53] : memref<1x4x16x128xf32, #tpu.memory_space<vmem>>, vector<1x4x16x128xf32>
    tpu.vector_store %arg9[%c0_50, %c0_51, %c0_52, %c0_53], %101 {strides = array<i32>} : memref<1x4x16x128xf32, #tpu.memory_space<vmem>>, vector<1x4x16x128xf32>,
    return
  }
  func.func @transform_0(%arg0: i32, %arg1: i32) -> (i32, i32, i32, i32) {
    %c0_i32 = arith.constant 0 : i32
    %c0_i32_0 = arith.constant 0 : i32
    %c0_i32_1 = arith.constant 0 : i32
    %c0_i32_2 = arith.constant 0 : i32
    return %arg0, %c0_i32, %c0_i32_0, %c0_i32_1 : i32, i32, i32, i32
  }
  func.func @transform_1(%arg0: i32, %arg1: i32) -> (i32, i32) {
    %c0_i32 = arith.constant 0 : i32
    %c0_i32_0 = arith.constant 0 : i32
    %c0_i32_1 = arith.constant 0 : i32
    return %c0_i32, %c0_i32_0 : i32, i32
  }
  func.func @transform_2(%arg0: i32, %arg1: i32) -> (i32, i32) {
    %c0_i32 = arith.constant 0 : i32
    %c0_i32_0 = arith.constant 0 : i32
    %c0_i32_1 = arith.constant 0 : i32
    return %c0_i32, %c0_i32_0 : i32, i32
  }
  func.func @transform_3(%arg0: i32, %arg1: i32) -> (i32, i32, i32) {
    %c0_i32 = arith.constant 0 : i32
    %c0_i32_0 = arith.constant 0 : i32
    %c0_i32_1 = arith.constant 0 : i32
    %c0_i32_2 = arith.constant 0 : i32
    return %c0_i32, %c0_i32_0, %c0_i32_1 : i32, i32, i32
  }
  func.func @transform_4(%arg0: i32, %arg1: i32) -> (i32, i32) {
    %c0_i32 = arith.constant 0 : i32
    %c0_i32_0 = arith.constant 0 : i32
    %c0_i32_1 = arith.constant 0 : i32
    return %c0_i32, %c0_i32_0 : i32, i32
  }
  func.func @transform_5(%arg0: i32, %arg1: i32) -> (i32, i32) {
    %c0_i32 = arith.constant 0 : i32
    %c0_i32_0 = arith.constant 0 : i32
    %c0_i32_1 = arith.constant 0 : i32
    return %c0_i32, %c0_i32_0 : i32, i32
  }
  func.func @transform_6(%arg0: i32, %arg1: i32) -> (i32, i32) {
    %c0_i32 = arith.constant 0 : i32
    %c0_i32_0 = arith.constant 0 : i32
    %c0_i32_1 = arith.constant 0 : i32
    return %c0_i32, %c0_i32_0 : i32, i32
  }
  func.func @transform_7(%arg0: i32, %arg1: i32) -> (i32, i32, i32, i32) {
    %c0_i32 = arith.constant 0 : i32
    %c0_i32_0 = arith.constant 0 : i32
    %c0_i32_1 = arith.constant 0 : i32
    return %arg0, %arg1, %c0_i32, %c0_i32_0 : i32, i32, i32, i32
  }
}

</mosaic_0001>

<llo_original>
// kernel: bottleneck_forward.1
$region0: #{bottleneck_forward.1}
  #allocation0 [shape = 'u32[]', space=smem, size = 0x4, offset = 0x4, fixed_abs, tag = 'smem constant byte address 0x4 - core index']
  #allocation1 [shape = 'u32[144,128]{1,0:T(1,128)}', space=vmem, size = 0x12000, scoped, tag = 'internal scratch']
  %s0 = inlined_call_operand.vmem [shape: f32[2,18,16,128], index: 0, kind: input, shape index: {}]
  %s1 = inlined_call_operand.vmem [shape: f32[128,128], index: 1, kind: input, shape index: {}]
  %s2 = inlined_call_operand.vmem [shape: f32[1,128], index: 2, kind: input, shape index: {}]
  %s3 = inlined_call_operand.vmem [shape: f32[9,128,128], index: 3, kind: input, shape index: {}]
  %s4 = inlined_call_operand.vmem [shape: f32[1,128], index: 4, kind: input, shape index: {}]
  %s5 = inlined_call_operand.vmem [shape: f32[128,128], index: 5, kind: input, shape index: {}]
  %s6 = inlined_call_operand.vmem [shape: f32[1,128], index: 6, kind: input, shape index: {}]
  %s7 = inlined_call_operand.vmem [shape: f32[2,16,16,128], index: 7, kind: output, shape index: {}]
  %s8 = sld [smem:[#allocation0]]
  $region61: #{bottleneck_forward.1} parent=0
    _
  %s10 = ssub.s32 1, %s8
  %s11 = scalar_select 0, %s10, %s8
  loop: start=0, step=1, limit=10
  $region2: #{bottleneck_forward.1} parent=0 // loop_pre_header
    _
  $region3: #{bottleneck_forward.1} parent=0 // loop_header
    %s13 = sphi 0, %s17
    %p14 = scmp.ge.s32.totalorder %s13, 10
    %s20 = sphi 0, %s32
    %s21 = sphi 0, %s28
    %s22 = sphi 0, %s20
    %s23 = sphi 0, %s21
    %s24 = sphi 0, %s22
    %s25 = sphi 0, %s23
    %s35 = sphi 0, %s37
    %s38 = sphi 0, %s35
    %s39 = sphi 0, %s38
    %s55 = sphi 0, %s39
    %s59 = sphi 0, %s59
    %s61 = sphi 0, %s59
    %s62 = sphi 0, %s61
    %s76 = sphi 0, %s62
    %s80 = sphi 0, %s80
    %s82 = sphi 0, %s80
    %s83 = sphi 0, %s82
    %s97 = sphi 0, %s83
    %s101 = sphi 0, %s101
    %s103 = sphi 0, %s101
    %s104 = sphi 0, %s103
    %s118 = sphi 0, %s104
    %s122 = sphi 0, %s122
    %s124 = sphi 0, %s122
    %s125 = sphi 0, %s124
    %s139 = sphi 0, %s125
    %s143 = sphi 0, %s143
    %s145 = sphi 0, %s143
    %s146 = sphi 0, %s145
    %s160 = sphi 0, %s146
    %s164 = sphi 0, %s164
    %s166 = sphi 0, %s164
    %s167 = sphi 0, %s166
    %s181 = sphi 0, %s167
    %s189 = sphi 0, %s191
    %s192 = sphi 0, %s189
    %s193 = sphi 0, %s192
    %s209 = sphi 0, %s193
  $region4: #{bottleneck_forward.1} parent=0 // loop_header_branch
    %16 = sbr.rel (%p14) target = $region8
  $region5: #{bottleneck_forward.1} parent=0 // loop_body
    %s18 = ssub.s32 %s13, 1
    %s19 = ssub.s32 %s13, 2
    %s26 = sadd.s32 1, %s21
    %p27 = scmp.ge.s32.totalorder %s26, 4
    %s28 = scalar_select %p27, 0, %s26
    %s29 = sadd.s32 1, %s20
    %s30 = scalar_select %p27, %s29, %s20
    %p31 = scmp.ge.s32.totalorder %s30, 2
    %s32 = scalar_select %p31, 0, %s30
    %s33 = ssub.s32 %s20, %s32
    %p34 = scmp.eq.s32.totalorder %s33, 0
    %s36 = sadd.s32 %s35, 1
    %s37 = scalar_select %p34, %s35, %s36
    %p40 = pneg %p34
    %p41 = scmp.eq.s32.totalorder %s13, 7
    %p42 = por %p40, %p41
    %p43 = scmp.ne.s32.totalorder %s35, %s38
    %p44 = scmp.eq.s32.totalorder %s13, 0
    %p45 = por %p43, %p44
    %p46 = scmp.ne.s32.totalorder %s35, %s38
    %p47 = scmp.eq.s32.totalorder %s18, 7
    %p48 = por %p46, %p47
    %p49 = scmp.ne.s32.totalorder %s38, %s39
    %p50 = scmp.eq.s32.totalorder %s18, 0
    %p51 = por %p49, %p50
    %p52 = scmp.ne.s32.totalorder %s38, %s39
    %p53 = scmp.eq.s32.totalorder %s19, 7
    %p54 = por %p52, %p53
    %p56 = scmp.ne.s32.totalorder %s39, %s55
    %p57 = scmp.eq.s32.totalorder %s19, 0
    %p58 = por %p56, %p57
    %s60 = sadd.s32 %s59, 1
    %p63 = scmp.eq.s32.totalorder %s13, 7
    %p64 = scmp.ne.s32.totalorder %s59, %s61
    %p65 = scmp.eq.s32.totalorder %s13, 0
    %p66 = por %p64, %p65
    %p67 = scmp.ne.s32.totalorder %s59, %s61
    %p68 = scmp.eq.s32.totalorder %s18, 7
    %p69 = por %p67, %p68
    %p70 = scmp.ne.s32.totalorder %s61, %s62
    %p71 = scmp.eq.s32.totalorder %s18, 0
    %p72 = por %p70, %p71
    %p73 = scmp.ne.s32.totalorder %s61, %s62
    %p74 = scmp.eq.s32.totalorder %s19, 7
    %p75 = por %p73, %p74
    %p77 = scmp.ne.s32.totalorder %s62, %s76
    %p78 = scmp.eq.s32.totalorder %s19, 0
    %p79 = por %p77, %p78
    %s81 = sadd.s32 %s80, 1
    %p84 = scmp.eq.s32.totalorder %s13, 7
    %p85 = scmp.ne.s32.totalorder %s80, %s82
    %p86 = scmp.eq.s32.totalorder %s13, 0
    %p87 = por %p85, %p86
    %p88 = scmp.ne.s32.totalorder %s80, %s82
    %p89 = scmp.eq.s32.totalorder %s18, 7
    %p90 = por %p88, %p89
    %p91 = scmp.ne.s32.totalorder %s82, %s83
    %p92 = scmp.eq.s32.totalorder %s18, 0
    %p93 = por %p91, %p92
    %p94 = scmp.ne.s32.totalorder %s82, %s83
    %p95 = scmp.eq.s32.totalorder %s19, 7
    %p96 = por %p94, %p95
    %p98 = scmp.ne.s32.totalorder %s83, %s97
    %p99 = scmp.eq.s32.totalorder %s19, 0
    %p100 = por %p98, %p99
    %s102 = sadd.s32 %s101, 1
    %p105 = scmp.eq.s32.totalorder %s13, 7
    %p106 = scmp.ne.s32.totalorder %s101, %s103
    %p107 = scmp.eq.s32.totalorder %s13, 0
    %p108 = por %p106, %p107
    %p109 = scmp.ne.s32.totalorder %s101, %s103
    %p110 = scmp.eq.s32.totalorder %s18, 7
    %p111 = por %p109, %p110
    %p112 = scmp.ne.s32.totalorder %s103, %s104
    %p113 = scmp.eq.s32.totalorder %s18, 0
    %p114 = por %p112, %p113
    %p115 = scmp.ne.s32.totalorder %s103, %s104
    %p116 = scmp.eq.s32.totalorder %s19, 7
    %p117 = por %p115, %p116
    %p119 = scmp.ne.s32.totalorder %s104, %s118
    %p120 = scmp.eq.s32.totalorder %s19, 0
    %p121 = por %p119, %p120
    %s123 = sadd.s32 %s122, 1
    %p126 = scmp.eq.s32.totalorder %s13, 7
    %p127 = scmp.ne.s32.totalorder %s122, %s124
    %p128 = scmp.eq.s32.totalorder %s13, 0
    %p129 = por %p127, %p128
    %p130 = scmp.ne.s32.totalorder %s122, %s124
    %p131 = scmp.eq.s32.totalorder %s18, 7
    %p132 = por %p130, %p131
    %p133 = scmp.ne.s32.totalorder %s124, %s125
    %p134 = scmp.eq.s32.totalorder %s18, 0
    %p135 = por %p133, %p134
    %p136 = scmp.ne.s32.totalorder %s124, %s125
    %p137 = scmp.eq.s32.totalorder %s19, 7
    %p138 = por %p136, %p137
    %p140 = scmp.ne.s32.totalorder %s125, %s139
    %p141 = scmp.eq.s32.totalorder %s19, 0
    %p142 = por %p140, %p141
    %s144 = sadd.s32 %s143, 1
    %p147 = scmp.eq.s32.totalorder %s13, 7
    %p148 = scmp.ne.s32.totalorder %s143, %s145
    %p149 = scmp.eq.s32.totalorder %s13, 0
    %p150 = por %p148, %p149
    %p151 = scmp.ne.s32.totalorder %s143, %s145
    %p152 = scmp.eq.s32.totalorder %s18, 7
    %p153 = por %p151, %p152
    %p154 = scmp.ne.s32.totalorder %s145, %s146
    %p155 = scmp.eq.s32.totalorder %s18, 0
    %p156 = por %p154, %p155
    %p157 = scmp.ne.s32.totalorder %s145, %s146
    %p158 = scmp.eq.s32.totalorder %s19, 7
    %p159 = por %p157, %p158
    %p161 = scmp.ne.s32.totalorder %s146, %s160
    %p162 = scmp.eq.s32.totalorder %s19, 0
    %p163 = por %p161, %p162
    %s165 = sadd.s32 %s164, 1
    %p168 = scmp.eq.s32.totalorder %s13, 7
    %p169 = scmp.ne.s32.totalorder %s164, %s166
    %p170 = scmp.eq.s32.totalorder %s13, 0
    %p171 = por %p169, %p170
    %p172 = scmp.ne.s32.totalorder %s164, %s166
    %p173 = scmp.eq.s32.totalorder %s18, 7
    %p174 = por %p172, %p173
    %p175 = scmp.ne.s32.totalorder %s166, %s167
    %p176 = scmp.eq.s32.totalorder %s18, 0
    %p177 = por %p175, %p176
    %p178 = scmp.ne.s32.totalorder %s166, %s167
    %p179 = scmp.eq.s32.totalorder %s19, 7
    %p180 = por %p178, %p179
    %p182 = scmp.ne.s32.totalorder %s167, %s181
    %p183 = scmp.eq.s32.totalorder %s19, 0
    %p184 = por %p182, %p183
    %s185 = ssub.s32 %s20, %s32
    %s186 = ssub.s32 %s21, %s28
    %s187 = sor.u32 %s185, %s186
    %p188 = scmp.eq.s32.totalorder %s187, 0
    %s190 = sadd.s32 %s189, 1
    %s191 = scalar_select %p188, %s189, %s190
    %p194 = pneg %p188
    %p195 = scmp.eq.s32.totalorder %s13, 7
    %p196 = por %p194, %p195
    %p197 = scmp.ne.s32.totalorder %s189, %s192
    %p198 = scmp.eq.s32.totalorder %s13, 0
    %p199 = por %p197, %p198
    %p200 = scmp.ne.s32.totalorder %s189, %s192
    %p201 = scmp.eq.s32.totalorder %s18, 7
    %p202 = por %p200, %p201
    %p203 = scmp.ne.s32.totalorder %s192, %s193
    %p204 = scmp.eq.s32.totalorder %s18, 0
    %p205 = por %p203, %p204
    %p206 = scmp.ne.s32.totalorder %s192, %s193
    %p207 = scmp.eq.s32.totalorder %s19, 7
    %p208 = por %p206, %p207
    %p210 = scmp.ne.s32.totalorder %s193, %s209
    %p211 = scmp.eq.s32.totalorder %s19, 0
    %p212 = por %p210, %p211
    %p213 = scmp.le.s32.totalorder 1, %s13
    %p214 = scmp.lt.s32.totalorder %s13, 9
    %p215 = pnand %p213, %p214
    %p216 = pneg %p215
    // Predicated region
    $region9: #{bottleneck_forward.1} parent=5 // pred_check
      _
    $region10: #{bottleneck_forward.1} parent=5 // pred_check_branch
      %218 = sbr.rel (%p215) target = $region12
    $region11: #{bottleneck_forward.1} parent=5 // pred_region
      %s219 = ssub.s32 %s13, 1
      // Predicated region
      $region13: #{bottleneck_forward.1} parent=11 // pred_check
        %p220 = pneg %p72
      $region14: #{bottleneck_forward.1} parent=11 // pred_check_branch
        %222 = sbr.rel (%p220) target = $region16
      $region15: #{bottleneck_forward.1} parent=11 // pred_region
        _
      $region16: #{bottleneck_forward.1} parent=11 // pred_fallthru
        _
      // Predicated region
      $region17: #{bottleneck_forward.1} parent=11 // pred_check
        %p223 = pneg %p93
      $region18: #{bottleneck_forward.1} parent=11 // pred_check_branch
        %225 = sbr.rel (%p223) target = $region20
      $region19: #{bottleneck_forward.1} parent=11 // pred_region
        _
      $region20: #{bottleneck_forward.1} parent=11 // pred_fallthru
        _
      // Predicated region
      $region21: #{bottleneck_forward.1} parent=11 // pred_check
        %p226 = pneg %p114
      $region22: #{bottleneck_forward.1} parent=11 // pred_check_branch
        %228 = sbr.rel (%p226) target = $region24
      $region23: #{bottleneck_forward.1} parent=11 // pred_region
        _
      $region24: #{bottleneck_forward.1} parent=11 // pred_fallthru
        _
      // Predicated region
      $region25: #{bottleneck_forward.1} parent=11 // pred_check
        %p229 = pneg %p135
      $region26: #{bottleneck_forward.1} parent=11 // pred_check_branch
        %231 = sbr.rel (%p229) target = $region28
      $region27: #{bottleneck_forward.1} parent=11 // pred_region
        _
      $region28: #{bottleneck_forward.1} parent=11 // pred_fallthru
        _
      // Predicated region
      $region29: #{bottleneck_forward.1} parent=11 // pred_check
        %p232 = pneg %p156
      $region30: #{bottleneck_forward.1} parent=11 // pred_check_branch
        %234 = sbr.rel (%p232) target = $region32
      $region31: #{bottleneck_forward.1} parent=11 // pred_region
        _
      $region32: #{bottleneck_forward.1} parent=11 // pred_fallthru
        _
      // Predicated region
      $region33: #{bottleneck_forward.1} parent=11 // pred_check
        %p235 = pneg %p177
      $region34: #{bottleneck_forward.1} parent=11 // pred_check_branch
        %237 = sbr.rel (%p235) target = $region36
      $region35: #{bottleneck_forward.1} parent=11 // pred_region
        _
      $region36: #{bottleneck_forward.1} parent=11 // pred_fallthru
        _
    $region12: #{bottleneck_forward.1} parent=5 // pred_fallthru
      _
    %p238 = scmp.lt.s32.totalorder %s13, 8
    // Predicated region
    $region37: #{bottleneck_forward.1} parent=5 // pred_check
      %p239 = pneg %p238
    $region38: #{bottleneck_forward.1} parent=5 // pred_check_branch
      %241 = sbr.rel (%p239) target = $region40
    $region39: #{bottleneck_forward.1} parent=5 // pred_region
      // Predicated region
      $region41: #{bottleneck_forward.1} parent=39 // pred_check
        %p242 = pneg %p45
      $region42: #{bottleneck_forward.1} parent=39 // pred_check_branch
        %244 = sbr.rel (%p242) target = $region44
      $region43: #{bottleneck_forward.1} parent=39 // pred_region
        %p245 = scmp.lt.s32.totalorder %s20, 1
        %s246 = scalar_select %p245, %s20, 1
        %s247 = smul.addr %s246, 36
        %s248 = smul.addr %s247, 8
        %s249 = scalar_lea.vmem %s0, %s248
      $region44: #{bottleneck_forward.1} parent=39 // pred_fallthru
        _
    $region40: #{bottleneck_forward.1} parent=5 // pred_fallthru
      _
    %p250 = scmp.le.s32.totalorder 1, %s13
    %p251 = scmp.lt.s32.totalorder %s13, 9
    %p252 = pnand %p250, %p251
    %p253 = pneg %p252
    // Predicated region
    $region45: #{bottleneck_forward.1} parent=5 // pred_check
      _
    $region46: #{bottleneck_forward.1} parent=5 // pred_check_branch
      %255 = sbr.rel (%p252) target = $region48
    $region47: #{bottleneck_forward.1} parent=5 // pred_region
      %s256 = ssub.s32 %s13, 1
      %p257 = scmp.lt.s32.totalorder %s22, 1
      %s258 = scalar_select %p257, %s22, 1
      %s259 = smul.addr %s258, 36
      %s260 = smul.addr %s259, 8
      %s261 = scalar_lea.vmem %s0, %s260
      %p262 = pneg %p51
      %p263 = pneg %p48
      %p264 = pneg %p72
      %p265 = pneg %p69
      %p266 = pneg %p93
      %p267 = pneg %p90
      %p268 = pneg %p114
      %p269 = pneg %p111
      %p270 = pneg %p135
      %p271 = pneg %p132
      %p272 = pneg %p156
      %p273 = pneg %p153
      %p274 = pneg %p177
      %p275 = pneg %p174
      %p276 = pneg %p205
      %p277 = pneg %p202
      %s278 = smul.u32 4, %s23
      %p279 = scmp.lt.s32.totalorder %s22, 1
      %s280 = scalar_select %p279, %s22, 1
      %p281 = scmp.lt.s32.totalorder %s278, 15
      %s282 = scalar_select %p281, %s278, 15
      %s283 = smul.addr %s282, 2
      %s284 = smul.addr %s280, 32
      %s285 = sadd.s32 %s283, %s284
      %s286 = smul.addr %s285, 8
      %s287 = scalar_lea.vmem %s7, %s286
      %p288 = scmp.lt.s32.totalorder %s22, 1
      %s289 = scalar_select %p288, %s22, 1
      %s290 = smul.addr %s289, 36
      %s291 = smul.addr %s290, 8
      %s292 = scalar_lea.vmem %s0, %s291
      %s293 = smul.u32 4, %s23
      %p294 = scmp.lt.s32.totalorder %s22, 1
      %s295 = scalar_select %p294, %s22, 1
      %p296 = scmp.lt.s32.totalorder %s293, 15
      %s297 = scalar_select %p296, %s293, 15
      %s298 = smul.addr %s297, 2
      %s299 = smul.addr %s295, 32
      %s300 = sadd.s32 %s298, %s299
      %s301 = smul.addr %s300, 8
      %s302 = scalar_lea.vmem %s7, %s301
      %s303 = smul.u32 4, %s23
      %s304 = smul.u32 %s23, 4
      %s305 = smul.u32 %s304, 16
      %s306 = scalar_lea.vmem %s292, %s305
      %v307 = vld [vmem:[%s306] sm:$0xff]
      %v308 = vld [vmem:[%s306 + $0x8] sm:$0xff]
      %v309 = vld [vmem:[%s306 + $0x10] sm:$0xff]
      %v310 = vld [vmem:[%s306 + $0x18] sm:$0xff]
      %v311 = vld [vmem:[%s306 + $0x20] sm:$0xff]
      %v312 = vld [vmem:[%s306 + $0x28] sm:$0xff]
      %v313 = vld [vmem:[%s306 + $0x30] sm:$0xff]
      %v314 = vld [vmem:[%s306 + $0x38] sm:$0xff]
      %v315 = vld [vmem:[%s306 + $0x40] sm:$0xff]
      %v316 = vld [vmem:[%s306 + $0x48] sm:$0xff]
      %v317 = vld [vmem:[%s306 + $0x50] sm:$0xff]
      %v318 = vld [vmem:[%s306 + $0x58] sm:$0xff]
      %v319 = vld [vmem:[%s1] sm:$0xff]
      %v320 = vld [vmem:[%s1 + $0x8] sm:$0xff]
      %v321 = vld [vmem:[%s1 + $0x10] sm:$0xff]
      %v322 = vld [vmem:[%s1 + $0x18] sm:$0xff]
      %v323 = vld [vmem:[%s1 + $0x20] sm:$0xff]
      %v324 = vld [vmem:[%s1 + $0x28] sm:$0xff]
      %v325 = vld [vmem:[%s1 + $0x30] sm:$0xff]
      %v326 = vld [vmem:[%s1 + $0x38] sm:$0xff]
      %v327 = vld [vmem:[%s1 + $0x40] sm:$0xff]
      %v328 = vld [vmem:[%s1 + $0x48] sm:$0xff]
      %v329 = vld [vmem:[%s1 + $0x50] sm:$0xff]
      %v330 = vld [vmem:[%s1 + $0x58] sm:$0xff]
      %v331 = vld [vmem:[%s1 + $0x60] sm:$0xff]
      %v332 = vld [vmem:[%s1 + $0x68] sm:$0xff]
      %v333 = vld [vmem:[%s1 + $0x70] sm:$0xff]
      %v334 = vld [vmem:[%s1 + $0x78] sm:$0xff]
      %v335 = vld [vmem:[%s2] sm:$0x1]
      %v337 = vlaneseq
      %v338 = vshrl.u32 %v337, 7
      %v339 = vsub.s32 0, %v338
      %v340 = vrot.slane %v335, %v339
      %342 = vmatprep.subr.mxu0 0.0
      %343 = vmatpush1.msra.mxu0 %v334
      %344 = vmatprep.subr.mxu0 0.0
      %345 = vmatpush1.msra.mxu0 %v333
      %346 = vmatprep.subr.mxu0 0.0
      %347 = vmatpush1.msra.mxu0 %v332
      %348 = vmatprep.subr.mxu0 0.0
      %349 = vmatpush1.msra.mxu0 %v331
      %350 = vmatprep.subr.mxu0 0.0
      %351 = vmatpush1.msra.mxu0 %v330
      %352 = vmatprep.subr.mxu0 0.0
      %353 = vmatpush1.msra.mxu0 %v329
      %354 = vmatprep.subr.mxu0 0.0
      %355 = vmatpush1.msra.mxu0 %v328
      %356 = vmatprep.subr.mxu0 0.0
      %357 = vmatpush1.msra.mxu0 %v327
      %358 = vmatprep.subr.mxu0 0.0
      %359 = vmatpush1.msra.mxu0 %v326
      %360 = vmatprep.subr.mxu0 0.0
      %361 = vmatpush1.msra.mxu0 %v325
      %362 = vmatprep.subr.mxu0 0.0
      %363 = vmatpush1.msra.mxu0 %v324
      %364 = vmatprep.subr.mxu0 0.0
      %365 = vmatpush1.msra.mxu0 %v323
      %366 = vmatprep.subr.mxu0 0.0
      %367 = vmatpush1.msra.mxu0 %v322
      %368 = vmatprep.subr.mxu0 0.0
      %369 = vmatpush1.msra.mxu0 %v321
      %370 = vmatprep.subr.mxu0 0.0
      %371 = vmatpush1.msra.mxu0 %v320
      %372 = vmatprep.subr.mxu0 0.0
      %373 = vmatpush1.msra.mxu0 %v319
      %374 = vmatprep.subr.mxu0 0.0
      %375 = vmatpush2.msra.mxu0 0.0
      %376 = vmatprep.subr.mxu0 0.0
      %377 = vmatpush2.msra.mxu0 0.0
      %378 = vmatprep.subr.mxu0 0.0
      %379 = vmatpush2.msra.mxu0 0.0
      %380 = vmatprep.subr.mxu0 0.0
      %381 = vmatpush2.msra.mxu0 0.0
      %382 = vmatprep.subr.mxu0 0.0
      %383 = vmatpush2.msra.mxu0 0.0
      %384 = vmatprep.subr.mxu0 0.0
      %385 = vmatpush2.msra.mxu0 0.0
      %386 = vmatprep.subr.mxu0 0.0
      %387 = vmatpush2.msra.mxu0 0.0
      %388 = vmatprep.subr.mxu0 0.0
      %389 = vmatpush2.msra.mxu0 0.0
      %390 = vmatprep.subr.mxu0 0.0
      %391 = vmatpush2.msra.mxu0 0.0
      %392 = vmatprep.subr.mxu0 0.0
      %393 = vmatpush2.msra.mxu0 0.0
      %394 = vmatprep.subr.mxu0 0.0
      %395 = vmatpush2.msra.mxu0 0.0
      %396 = vmatprep.subr.mxu0 0.0
      %397 = vmatpush2.msra.mxu0 0.0
      %398 = vmatprep.subr.mxu0 0.0
      %399 = vmatpush2.msra.mxu0 0.0
      %400 = vmatprep.subr.mxu0 0.0
      %401 = vmatpush2.msra.mxu0 0.0
      %402 = vmatprep.subr.mxu0 0.0
      %403 = vmatpush2.msra.mxu0 0.0
      %404 = vmatprep.subr.mxu0 0.0
      %405 = vmatpush2.msra.mxu0 0.0
      %406 = vmatprep.mubr.f32.mxu0 0.0
      %407 = vmatmul.mubr.f32.gmra.mxu0 %v307
      %v408 = vpop.f32.mrf.mxu0
      %v409 = vadd.f32 %v340, %v408
      %v410 = vpop.f32.mrf.mxu0
      %411 = vmatprep.mubr.f32.mxu0 0.0
      %412 = vmatmul.mubr.f32.gmra.mxu0 %v308
      %v413 = vpop.f32.mrf.mxu0
      %v414 = vadd.f32 %v340, %v413
      %v415 = vpop.f32.mrf.mxu0
      %416 = vmatprep.mubr.f32.mxu0 0.0
      %417 = vmatmul.mubr.f32.gmra.mxu0 %v309
      %v418 = vpop.f32.mrf.mxu0
      %v419 = vadd.f32 %v340, %v418
      %v420 = vpop.f32.mrf.mxu0
      %421 = vmatprep.mubr.f32.mxu0 0.0
      %422 = vmatmul.mubr.f32.gmra.mxu0 %v310
      %v423 = vpop.f32.mrf.mxu0
      %v424 = vadd.f32 %v340, %v423
      %v425 = vpop.f32.mrf.mxu0
      %426 = vmatprep.mubr.f32.mxu0 0.0
      %427 = vmatmul.mubr.f32.gmra.mxu0 %v311
      %v428 = vpop.f32.mrf.mxu0
      %v429 = vadd.f32 %v340, %v428
      %v430 = vpop.f32.mrf.mxu0
      %431 = vmatprep.mubr.f32.mxu0 0.0
      %432 = vmatmul.mubr.f32.gmra.mxu0 %v312
      %v433 = vpop.f32.mrf.mxu0
      %v434 = vadd.f32 %v340, %v433
      %v435 = vpop.f32.mrf.mxu0
      %436 = vmatprep.mubr.f32.mxu0 0.0
      %437 = vmatmul.mubr.f32.gmra.mxu0 %v313
      %v438 = vpop.f32.mrf.mxu0
      %v439 = vadd.f32 %v340, %v438
      %v440 = vpop.f32.mrf.mxu0
      %441 = vmatprep.mubr.f32.mxu0 0.0
      %442 = vmatmul.mubr.f32.gmra.mxu0 %v314
      %v443 = vpop.f32.mrf.mxu0
      %v444 = vadd.f32 %v340, %v443
      %v445 = vpop.f32.mrf.mxu0
      %446 = vmatprep.mubr.f32.mxu0 0.0
      %447 = vmatmul.mubr.f32.gmra.mxu0 %v315
      %v448 = vpop.f32.mrf.mxu0
      %v449 = vadd.f32 %v340, %v448
      %v450 = vpop.f32.mrf.mxu0
      %451 = vmatprep.mubr.f32.mxu0 0.0
      %452 = vmatmul.mubr.f32.gmra.mxu0 %v316
      %v453 = vpop.f32.mrf.mxu0
      %v454 = vadd.f32 %v340, %v453
      %v455 = vpop.f32.mrf.mxu0
      %456 = vmatprep.mubr.f32.mxu0 0.0
      %457 = vmatmul.mubr.f32.gmra.mxu0 %v317
      %v458 = vpop.f32.mrf.mxu0
      %v459 = vadd.f32 %v340, %v458
      %v460 = vpop.f32.mrf.mxu0
      %461 = vmatprep.mubr.f32.mxu0 0.0
      %462 = vmatmul.mubr.f32.gmra.mxu0 %v318
      %v463 = vpop.f32.mrf.mxu0
      %v464 = vadd.f32 %v340, %v463
      %v465 = vpop.f32.mrf.mxu0
      %466 = vdwg.mxu0
      %v467 = vmax.f32 %v409, 0.0
      %v468 = vmax.f32 %v414, 0.0
      %v469 = vmax.f32 %v419, 0.0
      %v470 = vmax.f32 %v424, 0.0
      %v471 = vmax.f32 %v429, 0.0
      %v472 = vmax.f32 %v434, 0.0
      %v473 = vmax.f32 %v439, 0.0
      %v474 = vmax.f32 %v444, 0.0
      %v475 = vmax.f32 %v449, 0.0
      %v476 = vmax.f32 %v454, 0.0
      %v477 = vmax.f32 %v459, 0.0
      %v478 = vmax.f32 %v464, 0.0
      %v479 = vlaneseq
      %v480 = vshrl.u32 %v479, 7
      %v481 = vadd.s32 %v480, 8
      %v482 = vadd.s32 %v480, 16
      %v483 = vadd.s32 %v480, 24
      %v484 = vadd.s32 %v480, 32
      %v485 = vadd.s32 %v480, 40
      %v486 = vadd.s32 %v480, 48
      %v487 = vadd.s32 %v480, 56
      %v488 = vadd.s32 %v480, 64
      %v489 = vadd.s32 %v480, 72
      %v490 = vadd.s32 %v480, 80
      %v491 = vadd.s32 %v480, 88
      %p492 = scmp.eq.s32.totalorder %s23, 0
      %s493 = scalar_select %p492, 16, 0
      %p494 = scmp.eq.s32.totalorder %s23, 3
      %s495 = scalar_select %p494, 80, 96
      %v496 = vstv %s493
      %vm497 = vcmp.ge.s32.totalorder %v480, %v496
      %vm498 = vcmp.ge.s32.totalorder %v481, %v496
      %vm499 = vcmp.ge.s32.totalorder %v482, %v496
      %vm500 = vcmp.ge.s32.totalorder %v483, %v496
      %vm501 = vcmp.ge.s32.totalorder %v484, %v496
      %vm502 = vcmp.ge.s32.totalorder %v485, %v496
      %vm503 = vcmp.ge.s32.totalorder %v486, %v496
      %vm504 = vcmp.ge.s32.totalorder %v487, %v496
      %vm505 = vcmp.ge.s32.totalorder %v488, %v496
      %vm506 = vcmp.ge.s32.totalorder %v489, %v496
      %vm507 = vcmp.ge.s32.totalorder %v490, %v496
      %vm508 = vcmp.ge.s32.totalorder %v491, %v496
      %v509 = vstv %s495
      %vm510 = vcmp.lt.s32.totalorder %v480, %v509
      %vm511 = vcmp.lt.s32.totalorder %v481, %v509
      %vm512 = vcmp.lt.s32.totalorder %v482, %v509
      %vm513 = vcmp.lt.s32.totalorder %v483, %v509
      %vm514 = vcmp.lt.s32.totalorder %v484, %v509
      %vm515 = vcmp.lt.s32.totalorder %v485, %v509
      %vm516 = vcmp.lt.s32.totalorder %v486, %v509
      %vm517 = vcmp.lt.s32.totalorder %v487, %v509
      %vm518 = vcmp.lt.s32.totalorder %v488, %v509
      %vm519 = vcmp.lt.s32.totalorder %v489, %v509
      %vm520 = vcmp.lt.s32.totalorder %v490, %v509
      %vm521 = vcmp.lt.s32.totalorder %v491, %v509
      %vm522 = vmand %vm497, %vm510
      %vm523 = vmand %vm498, %vm511
      %vm524 = vmand %vm499, %vm512
      %vm525 = vmand %vm500, %vm513
      %vm526 = vmand %vm501, %vm514
      %vm527 = vmand %vm502, %vm515
      %vm528 = vmand %vm503, %vm516
      %vm529 = vmand %vm504, %vm517
      %vm530 = vmand %vm505, %vm518
      %vm531 = vmand %vm506, %vm519
      %vm532 = vmand %vm507, %vm520
      %vm533 = vmand %vm508, %vm521
      %v534 = vsel %vm522, 1, 0
      %v535 = vsel %vm523, 1, 0
      %v536 = vsel %vm524, 1, 0
      %v537 = vsel %vm525, 1, 0
      %v538 = vsel %vm526, 1, 0
      %v539 = vsel %vm527, 1, 0
      %v540 = vsel %vm528, 1, 0
      %v541 = vsel %vm529, 1, 0
      %v542 = vsel %vm530, 1, 0
      %v543 = vsel %vm531, 1, 0
      %v544 = vsel %vm532, 1, 0
      %v545 = vsel %vm533, 1, 0
      %vm546 = vcmp.eq.s32.totalorder %v534, 1
      %vm547 = vcmp.eq.s32.totalorder %v535, 1
      %vm548 = vcmp.eq.s32.totalorder %v536, 1
      %vm549 = vcmp.eq.s32.totalorder %v537, 1
      %vm550 = vcmp.eq.s32.totalorder %v538, 1
      %vm551 = vcmp.eq.s32.totalorder %v539, 1
      %vm552 = vcmp.eq.s32.totalorder %v540, 1
      %vm553 = vcmp.eq.s32.totalorder %v541, 1
      %vm554 = vcmp.eq.s32.totalorder %v542, 1
      %vm555 = vcmp.eq.s32.totalorder %v543, 1
      %vm556 = vcmp.eq.s32.totalorder %v544, 1
      %vm557 = vcmp.eq.s32.totalorder %v545, 1
      %v558 = vsel %vm546, %v467, 0.0
      %v559 = vsel %vm547, %v468, 0.0
      %v560 = vsel %vm548, %v469, 0.0
      %v561 = vsel %vm549, %v470, 0.0
      %v562 = vsel %vm550, %v471, 0.0
      %v563 = vsel %vm551, %v472, 0.0
      %v564 = vsel %vm552, %v473, 0.0
      %v565 = vsel %vm553, %v474, 0.0
      %v566 = vsel %vm554, %v475, 0.0
      %v567 = vsel %vm555, %v476, 0.0
      %v568 = vsel %vm556, %v477, 0.0
      %v569 = vsel %vm557, %v478, 0.0
      %v570 = vand.u32 %v480, 15
      %v571 = vand.u32 %v481, 15
      %v572 = vand.u32 %v482, 15
      %v573 = vand.u32 %v483, 15
      %v574 = vand.u32 %v484, 15
      %v575 = vand.u32 %v485, 15
      %v576 = vand.u32 %v486, 15
      %v577 = vand.u32 %v487, 15
      %v578 = vand.u32 %v488, 15
      %v579 = vand.u32 %v489, 15
      %v580 = vand.u32 %v490, 15
      %v581 = vand.u32 %v491, 15
      %vm582 = vcmp.eq.s32.totalorder %v570, 0
      %vm583 = vcmp.eq.s32.totalorder %v571, 0
      %vm584 = vcmp.eq.s32.totalorder %v572, 0
      %vm585 = vcmp.eq.s32.totalorder %v573, 0
      %vm586 = vcmp.eq.s32.totalorder %v574, 0
      %vm587 = vcmp.eq.s32.totalorder %v575, 0
      %vm588 = vcmp.eq.s32.totalorder %v576, 0
      %vm589 = vcmp.eq.s32.totalorder %v577, 0
      %vm590 = vcmp.eq.s32.totalorder %v578, 0
      %vm591 = vcmp.eq.s32.totalorder %v579, 0
      %vm592 = vcmp.eq.s32.totalorder %v580, 0
      %vm593 = vcmp.eq.s32.totalorder %v581, 0
      %vm594 = vcmp.eq.s32.totalorder %v570, 15
      %vm595 = vcmp.eq.s32.totalorder %v571, 15
      %vm596 = vcmp.eq.s32.totalorder %v572, 15
      %vm597 = vcmp.eq.s32.totalorder %v573, 15
      %vm598 = vcmp.eq.s32.totalorder %v574, 15
      %vm599 = vcmp.eq.s32.totalorder %v575, 15
      %vm600 = vcmp.eq.s32.totalorder %v576, 15
      %vm601 = vcmp.eq.s32.totalorder %v577, 15
      %vm602 = vcmp.eq.s32.totalorder %v578, 15
      %vm603 = vcmp.eq.s32.totalorder %v579, 15
      %vm604 = vcmp.eq.s32.totalorder %v580, 15
      %vm605 = vcmp.eq.s32.totalorder %v581, 15
      %v606 = vrot.slane %v558, 7
      %v607 = vrot.slane %v559, 7
      %v608 = vrot.slane %v560, 7
      %v609 = vrot.slane %v561, 7
      %v610 = vrot.slane %v562, 7
      %v611 = vrot.slane %v563, 7
      %v612 = vrot.slane %v564, 7
      %v613 = vrot.slane %v565, 7
      %v614 = vrot.slane %v566, 7
      %v615 = vrot.slane %v567, 7
      %v616 = vrot.slane %v568, 7
      %v617 = vrot.slane %v569, 7
      %vm618 = vcmp.lt.s32.totalorder %v480, 1
      %v619 = vsel %vm618, %v616, %v617
      %v620 = vsel %vm618, %v615, %v616
      %v621 = vsel %vm618, %v614, %v615
      %v622 = vsel %vm618, %v613, %v614
      %v623 = vsel %vm618, %v612, %v613
      %v624 = vsel %vm618, %v611, %v612
      %v625 = vsel %vm618, %v610, %v611
      %v626 = vsel %vm618, %v609, %v610
      %v627 = vsel %vm618, %v608, %v609
      %v628 = vsel %vm618, %v607, %v608
      %v629 = vsel %vm618, %v606, %v607
      %v630 = vsel %vm618, %v617, %v606
      %v631 = vsel %vm582, 1, 0
      %v632 = vsel %vm583, 1, 0
      %v633 = vsel %vm584, 1, 0
      %v634 = vsel %vm585, 1, 0
      %v635 = vsel %vm586, 1, 0
      %v636 = vsel %vm587, 1, 0
      %v637 = vsel %vm588, 1, 0
      %v638 = vsel %vm589, 1, 0
      %v639 = vsel %vm590, 1, 0
      %v640 = vsel %vm591, 1, 0
      %v641 = vsel %vm592, 1, 0
      %v642 = vsel %vm593, 1, 0
      %vm643 = vcmp.eq.s32.totalorder %v631, 1
      %vm644 = vcmp.eq.s32.totalorder %v632, 1
      %vm645 = vcmp.eq.s32.totalorder %v633, 1
      %vm646 = vcmp.eq.s32.totalorder %v634, 1
      %vm647 = vcmp.eq.s32.totalorder %v635, 1
      %vm648 = vcmp.eq.s32.totalorder %v636, 1
      %vm649 = vcmp.eq.s32.totalorder %v637, 1
      %vm650 = vcmp.eq.s32.totalorder %v638, 1
      %vm651 = vcmp.eq.s32.totalorder %v639, 1
      %vm652 = vcmp.eq.s32.totalorder %v640, 1
      %vm653 = vcmp.eq.s32.totalorder %v641, 1
      %vm654 = vcmp.eq.s32.totalorder %v642, 1
      %v655 = vsel %vm643, 0.0, %v630
      %v656 = vsel %vm644, 0.0, %v629
      %v657 = vsel %vm645, 0.0, %v628
      %v658 = vsel %vm646, 0.0, %v627
      %v659 = vsel %vm647, 0.0, %v626
      %v660 = vsel %vm648, 0.0, %v625
      %v661 = vsel %vm649, 0.0, %v624
      %v662 = vsel %vm650, 0.0, %v623
      %v663 = vsel %vm651, 0.0, %v622
      %v664 = vsel %vm652, 0.0, %v621
      %v665 = vsel %vm653, 0.0, %v620
      %v666 = vsel %vm654, 0.0, %v619
      %v667 = vld [vmem:[%s3] sm:$0xff]
      %v668 = vld [vmem:[%s3 + $0x8] sm:$0xff]
      %v669 = vld [vmem:[%s3 + $0x10] sm:$0xff]
      %v670 = vld [vmem:[%s3 + $0x18] sm:$0xff]
      %v671 = vld [vmem:[%s3 + $0x20] sm:$0xff]
      %v672 = vld [vmem:[%s3 + $0x28] sm:$0xff]
      %v673 = vld [vmem:[%s3 + $0x30] sm:$0xff]
      %v674 = vld [vmem:[%s3 + $0x38] sm:$0xff]
      %v675 = vld [vmem:[%s3 + $0x40] sm:$0xff]
      %v676 = vld [vmem:[%s3 + $0x48] sm:$0xff]
      %v677 = vld [vmem:[%s3 + $0x50] sm:$0xff]
      %v678 = vld [vmem:[%s3 + $0x58] sm:$0xff]
      %v679 = vld [vmem:[%s3 + $0x60] sm:$0xff]
      %v680 = vld [vmem:[%s3 + $0x68] sm:$0xff]
      %v681 = vld [vmem:[%s3 + $0x70] sm:$0xff]
      %v682 = vld [vmem:[%s3 + $0x78] sm:$0xff]
      %s683 = scalar_lea.vmem %s3, 384
      %v684 = vld [vmem:[%s683] sm:$0xff]
      %v685 = vld [vmem:[%s683 + $0x8] sm:$0xff]
      %v686 = vld [vmem:[%s683 + $0x10] sm:$0xff]
      %v687 = vld [vmem:[%s683 + $0x18] sm:$0xff]
      %v688 = vld [vmem:[%s683 + $0x20] sm:$0xff]
      %v689 = vld [vmem:[%s683 + $0x28] sm:$0xff]
      %v690 = vld [vmem:[%s683 + $0x30] sm:$0xff]
      %v691 = vld [vmem:[%s683 + $0x38] sm:$0xff]
      %v692 = vld [vmem:[%s683 + $0x40] sm:$0xff]
      %v693 = vld [vmem:[%s683 + $0x48] sm:$0xff]
      %v694 = vld [vmem:[%s683 + $0x50] sm:$0xff]
      %v695 = vld [vmem:[%s683 + $0x58] sm:$0xff]
      %v696 = vld [vmem:[%s683 + $0x60] sm:$0xff]
      %v697 = vld [vmem:[%s683 + $0x68] sm:$0xff]
      %v698 = vld [vmem:[%s683 + $0x70] sm:$0xff]
      %v699 = vld [vmem:[%s683 + $0x78] sm:$0xff]
      %700 = vmatprep.subr.mxu0 0.0
      %701 = vmatpush1.msra.mxu0 %v699
      %702 = vmatprep.subr.mxu0 0.0
      %703 = vmatpush1.msra.mxu0 %v698
      %704 = vmatprep.subr.mxu0 0.0
      %705 = vmatpush1.msra.mxu0 %v697
      %706 = vmatprep.subr.mxu0 0.0
      %707 = vmatpush1.msra.mxu0 %v696
      %708 = vmatprep.subr.mxu0 0.0
      %709 = vmatpush1.msra.mxu0 %v695
      %710 = vmatprep.subr.mxu0 0.0
      %711 = vmatpush1.msra.mxu0 %v694
      %712 = vmatprep.subr.mxu0 0.0
      %713 = vmatpush1.msra.mxu0 %v693
      %714 = vmatprep.subr.mxu0 0.0
      %715 = vmatpush1.msra.mxu0 %v692
      %716 = vmatprep.subr.mxu0 0.0
      %717 = vmatpush1.msra.mxu0 %v691
      %718 = vmatprep.subr.mxu0 0.0
      %719 = vmatpush1.msra.mxu0 %v690
      %720 = vmatprep.subr.mxu0 0.0
      %721 = vmatpush1.msra.mxu0 %v689
      %722 = vmatprep.subr.mxu0 0.0
      %723 = vmatpush1.msra.mxu0 %v688
      %724 = vmatprep.subr.mxu0 0.0
      %725 = vmatpush1.msra.mxu0 %v687
      %726 = vmatprep.subr.mxu0 0.0
      %727 = vmatpush1.msra.mxu0 %v686
      %728 = vmatprep.subr.mxu0 0.0
      %729 = vmatpush1.msra.mxu0 %v685
      %730 = vmatprep.subr.mxu0 0.0
      %731 = vmatpush1.msra.mxu0 %v684
      %732 = vmatprep.subr.mxu0 0.0
      %733 = vmatpush2.msra.mxu0 0.0
      %734 = vmatprep.subr.mxu0 0.0
      %735 = vmatpush2.msra.mxu0 0.0
      %736 = vmatprep.subr.mxu0 0.0
      %737 = vmatpush2.msra.mxu0 0.0
      %738 = vmatprep.subr.mxu0 0.0
      %739 = vmatpush2.msra.mxu0 0.0
      %740 = vmatprep.subr.mxu0 0.0
      %741 = vmatpush2.msra.mxu0 0.0
      %742 = vmatprep.subr.mxu0 0.0
      %743 = vmatpush2.msra.mxu0 0.0
      %744 = vmatprep.subr.mxu0 0.0
      %745 = vmatpush2.msra.mxu0 0.0
      %746 = vmatprep.subr.mxu0 0.0
      %747 = vmatpush2.msra.mxu0 0.0
      %748 = vmatprep.subr.mxu0 0.0
      %749 = vmatpush2.msra.mxu0 0.0
      %750 = vmatprep.subr.mxu0 0.0
      %751 = vmatpush2.msra.mxu0 0.0
      %752 = vmatprep.subr.mxu0 0.0
      %753 = vmatpush2.msra.mxu0 0.0
      %754 = vmatprep.subr.mxu0 0.0
      %755 = vmatpush2.msra.mxu0 0.0
      %756 = vmatprep.subr.mxu0 0.0
      %757 = vmatpush2.msra.mxu0 0.0
      %758 = vmatprep.subr.mxu0 0.0
      %759 = vmatpush2.msra.mxu0 0.0
      %760 = vmatprep.subr.mxu0 0.0
      %761 = vmatpush2.msra.mxu0 0.0
      %762 = vmatprep.subr.mxu0 0.0
      %763 = vmatpush2.msra.mxu0 0.0
      %764 = vmatprep.mubr.f32.mxu0 0.0
      %765 = vmatmul.mubr.f32.gmra.mxu0 %v657
      %v766 = vpop.f32.mrf.mxu0
      %v767 = vadd.f32 0.0, %v766
      %v768 = vpop.f32.mrf.mxu0
      %769 = vmatprep.mubr.f32.mxu0 0.0
      %770 = vmatmul.mubr.f32.gmra.mxu0 %v658
      %v771 = vpop.f32.mrf.mxu0
      %v772 = vadd.f32 0.0, %v771
      %v773 = vpop.f32.mrf.mxu0
      %774 = vmatprep.mubr.f32.mxu0 0.0
      %775 = vmatmul.mubr.f32.gmra.mxu0 %v659
      %v776 = vpop.f32.mrf.mxu0
      %v777 = vadd.f32 0.0, %v776
      %v778 = vpop.f32.mrf.mxu0
      %779 = vmatprep.mubr.f32.mxu0 0.0
      %780 = vmatmul.mubr.f32.gmra.mxu0 %v660
      %v781 = vpop.f32.mrf.mxu0
      %v782 = vadd.f32 0.0, %v781
      %v783 = vpop.f32.mrf.mxu0
      %784 = vmatprep.mubr.f32.mxu0 0.0
      %785 = vmatmul.mubr.f32.gmra.mxu0 %v661
      %v786 = vpop.f32.mrf.mxu0
      %v787 = vadd.f32 0.0, %v786
      %v788 = vpop.f32.mrf.mxu0
      %789 = vmatprep.mubr.f32.mxu0 0.0
      %790 = vmatmul.mubr.f32.gmra.mxu0 %v662
      %v791 = vpop.f32.mrf.mxu0
      %v792 = vadd.f32 0.0, %v791
      %v793 = vpop.f32.mrf.mxu0
      %794 = vmatprep.mubr.f32.mxu0 0.0
      %795 = vmatmul.mubr.f32.gmra.mxu0 %v663
      %v796 = vpop.f32.mrf.mxu0
      %v797 = vadd.f32 0.0, %v796
      %v798 = vpop.f32.mrf.mxu0
      %799 = vmatprep.mubr.f32.mxu0 0.0
      %800 = vmatmul.mubr.f32.gmra.mxu0 %v664
      %v801 = vpop.f32.mrf.mxu0
      %v802 = vadd.f32 0.0, %v801
      %v803 = vpop.f32.mrf.mxu0
      %804 = vdwg.mxu0
      %805 = vmatprep.subr.mxu0 0.0
      %806 = vmatpush1.msra.mxu0 %v682
      %807 = vmatprep.subr.mxu0 0.0
      %808 = vmatpush1.msra.mxu0 %v681
      %809 = vmatprep.subr.mxu0 0.0
      %810 = vmatpush1.msra.mxu0 %v680
      %811 = vmatprep.subr.mxu0 0.0
      %812 = vmatpush1.msra.mxu0 %v679
      %813 = vmatprep.subr.mxu0 0.0
      %814 = vmatpush1.msra.mxu0 %v678
      %815 = vmatprep.subr.mxu0 0.0
      %816 = vmatpush1.msra.mxu0 %v677
      %817 = vmatprep.subr.mxu0 0.0
      %818 = vmatpush1.msra.mxu0 %v676
      %819 = vmatprep.subr.mxu0 0.0
      %820 = vmatpush1.msra.mxu0 %v675
      %821 = vmatprep.subr.mxu0 0.0
      %822 = vmatpush1.msra.mxu0 %v674
      %823 = vmatprep.subr.mxu0 0.0
      %824 = vmatpush1.msra.mxu0 %v673
      %825 = vmatprep.subr.mxu0 0.0
      %826 = vmatpush1.msra.mxu0 %v672
      %827 = vmatprep.subr.mxu0 0.0
      %828 = vmatpush1.msra.mxu0 %v671
      %829 = vmatprep.subr.mxu0 0.0
      %830 = vmatpush1.msra.mxu0 %v670
      %831 = vmatprep.subr.mxu0 0.0
      %832 = vmatpush1.msra.mxu0 %v669
      %833 = vmatprep.subr.mxu0 0.0
      %834 = vmatpush1.msra.mxu0 %v668
      %835 = vmatprep.subr.mxu0 0.0
      %836 = vmatpush1.msra.mxu0 %v667
      %837 = vmatprep.subr.mxu0 0.0
      %838 = vmatpush2.msra.mxu0 0.0
      %839 = vmatprep.subr.mxu0 0.0
      %840 = vmatpush2.msra.mxu0 0.0
      %841 = vmatprep.subr.mxu0 0.0
      %842 = vmatpush2.msra.mxu0 0.0
      %843 = vmatprep.subr.mxu0 0.0
      %844 = vmatpush2.msra.mxu0 0.0
      %845 = vmatprep.subr.mxu0 0.0
      %846 = vmatpush2.msra.mxu0 0.0
      %847 = vmatprep.subr.mxu0 0.0
      %848 = vmatpush2.msra.mxu0 0.0
      %849 = vmatprep.subr.mxu0 0.0
      %850 = vmatpush2.msra.mxu0 0.0
      %851 = vmatprep.subr.mxu0 0.0
      %852 = vmatpush2.msra.mxu0 0.0
      %853 = vmatprep.subr.mxu0 0.0
      %854 = vmatpush2.msra.mxu0 0.0
      %855 = vmatprep.subr.mxu0 0.0
      %856 = vmatpush2.msra.mxu0 0.0
      %857 = vmatprep.subr.mxu0 0.0
      %858 = vmatpush2.msra.mxu0 0.0
      %859 = vmatprep.subr.mxu0 0.0
      %860 = vmatpush2.msra.mxu0 0.0
      %861 = vmatprep.subr.mxu0 0.0
      %862 = vmatpush2.msra.mxu0 0.0
      %863 = vmatprep.subr.mxu0 0.0
      %864 = vmatpush2.msra.mxu0 0.0
      %865 = vmatprep.subr.mxu0 0.0
      %866 = vmatpush2.msra.mxu0 0.0
      %867 = vmatprep.subr.mxu0 0.0
      %868 = vmatpush2.msra.mxu0 0.0
      %869 = vmatprep.mubr.f32.mxu0 0.0
      %870 = vmatmul.mubr.f32.gmra.mxu0 %v655
      %v871 = vpop.f32.mrf.mxu0
      %v872 = vadd.f32 %v767, %v871
      %v873 = vpop.f32.mrf.mxu0
      %874 = vmatprep.mubr.f32.mxu0 0.0
      %875 = vmatmul.mubr.f32.gmra.mxu0 %v656
      %v876 = vpop.f32.mrf.mxu0
      %v877 = vadd.f32 %v772, %v876
      %v878 = vpop.f32.mrf.mxu0
      %879 = vmatprep.mubr.f32.mxu0 0.0
      %880 = vmatmul.mubr.f32.gmra.mxu0 %v657
      %v881 = vpop.f32.mrf.mxu0
      %v882 = vadd.f32 %v777, %v881
      %v883 = vpop.f32.mrf.mxu0
      %884 = vmatprep.mubr.f32.mxu0 0.0
      %885 = vmatmul.mubr.f32.gmra.mxu0 %v658
      %v886 = vpop.f32.mrf.mxu0
      %v887 = vadd.f32 %v782, %v886
      %v888 = vpop.f32.mrf.mxu0
      %889 = vmatprep.mubr.f32.mxu0 0.0
      %890 = vmatmul.mubr.f32.gmra.mxu0 %v659
      %v891 = vpop.f32.mrf.mxu0
      %v892 = vadd.f32 %v787, %v891
      %v893 = vpop.f32.mrf.mxu0
      %894 = vmatprep.mubr.f32.mxu0 0.0
      %895 = vmatmul.mubr.f32.gmra.mxu0 %v660
      %v896 = vpop.f32.mrf.mxu0
      %v897 = vadd.f32 %v792, %v896
      %v898 = vpop.f32.mrf.mxu0
      %899 = vmatprep.mubr.f32.mxu0 0.0
      %900 = vmatmul.mubr.f32.gmra.mxu0 %v661
      %v901 = vpop.f32.mrf.mxu0
      %v902 = vadd.f32 %v797, %v901
      %v903 = vpop.f32.mrf.mxu0
      %904 = vmatprep.mubr.f32.mxu0 0.0
      %905 = vmatmul.mubr.f32.gmra.mxu0 %v662
      %v906 = vpop.f32.mrf.mxu0
      %v907 = vadd.f32 %v802, %v906
      %v908 = vpop.f32.mrf.mxu0
      %909 = vdwg.mxu0
      %s910 = scalar_lea.vmem %s3, 768
      %v911 = vld [vmem:[%s910] sm:$0xff]
      %v912 = vld [vmem:[%s910 + $0x8] sm:$0xff]
      %v913 = vld [vmem:[%s910 + $0x10] sm:$0xff]
      %v914 = vld [vmem:[%s910 + $0x18] sm:$0xff]
      %v915 = vld [vmem:[%s910 + $0x20] sm:$0xff]
      %v916 = vld [vmem:[%s910 + $0x28] sm:$0xff]
      %v917 = vld [vmem:[%s910 + $0x30] sm:$0xff]
      %v918 = vld [vmem:[%s910 + $0x38] sm:$0xff]
      %v919 = vld [vmem:[%s910 + $0x40] sm:$0xff]
      %v920 = vld [vmem:[%s910 + $0x48] sm:$0xff]
      %v921 = vld [vmem:[%s910 + $0x50] sm:$0xff]
      %v922 = vld [vmem:[%s910 + $0x58] sm:$0xff]
      %v923 = vld [vmem:[%s910 + $0x60] sm:$0xff]
      %v924 = vld [vmem:[%s910 + $0x68] sm:$0xff]
      %v925 = vld [vmem:[%s910 + $0x70] sm:$0xff]
      %v926 = vld [vmem:[%s910 + $0x78] sm:$0xff]
      %927 = vmatprep.subr.mxu0 0.0
      %928 = vmatpush1.msra.mxu0 %v926
      %929 = vmatprep.subr.mxu0 0.0
      %930 = vmatpush1.msra.mxu0 %v925
      %931 = vmatprep.subr.mxu0 0.0
      %932 = vmatpush1.msra.mxu0 %v924
      %933 = vmatprep.subr.mxu0 0.0
      %934 = vmatpush1.msra.mxu0 %v923
      %935 = vmatprep.subr.mxu0 0.0
      %936 = vmatpush1.msra.mxu0 %v922
      %937 = vmatprep.subr.mxu0 0.0
      %938 = vmatpush1.msra.mxu0 %v921
      %939 = vmatprep.subr.mxu0 0.0
      %940 = vmatpush1.msra.mxu0 %v920
      %941 = vmatprep.subr.mxu0 0.0
      %942 = vmatpush1.msra.mxu0 %v919
      %943 = vmatprep.subr.mxu0 0.0
      %944 = vmatpush1.msra.mxu0 %v918
      %945 = vmatprep.subr.mxu0 0.0
      %946 = vmatpush1.msra.mxu0 %v917
      %947 = vmatprep.subr.mxu0 0.0
      %948 = vmatpush1.msra.mxu0 %v916
      %949 = vmatprep.subr.mxu0 0.0
      %950 = vmatpush1.msra.mxu0 %v915
      %951 = vmatprep.subr.mxu0 0.0
      %952 = vmatpush1.msra.mxu0 %v914
      %953 = vmatprep.subr.mxu0 0.0
      %954 = vmatpush1.msra.mxu0 %v913
      %955 = vmatprep.subr.mxu0 0.0
      %956 = vmatpush1.msra.mxu0 %v912
      %957 = vmatprep.subr.mxu0 0.0
      %958 = vmatpush1.msra.mxu0 %v911
      %959 = vmatprep.subr.mxu0 0.0
      %960 = vmatpush2.msra.mxu0 0.0
      %961 = vmatprep.subr.mxu0 0.0
      %962 = vmatpush2.msra.mxu0 0.0
      %963 = vmatprep.subr.mxu0 0.0
      %964 = vmatpush2.msra.mxu0 0.0
      %965 = vmatprep.subr.mxu0 0.0
      %966 = vmatpush2.msra.mxu0 0.0
      %967 = vmatprep.subr.mxu0 0.0
      %968 = vmatpush2.msra.mxu0 0.0
      %969 = vmatprep.subr.mxu0 0.0
      %970 = vmatpush2.msra.mxu0 0.0
      %971 = vmatprep.subr.mxu0 0.0
      %972 = vmatpush2.msra.mxu0 0.0
      %973 = vmatprep.subr.mxu0 0.0
      %974 = vmatpush2.msra.mxu0 0.0
      %975 = vmatprep.subr.mxu0 0.0
      %976 = vmatpush2.msra.mxu0 0.0
      %977 = vmatprep.subr.mxu0 0.0
      %978 = vmatpush2.msra.mxu0 0.0
      %979 = vmatprep.subr.mxu0 0.0
      %980 = vmatpush2.msra.mxu0 0.0
      %981 = vmatprep.subr.mxu0 0.0
      %982 = vmatpush2.msra.mxu0 0.0
      %983 = vmatprep.subr.mxu0 0.0
      %984 = vmatpush2.msra.mxu0 0.0
      %985 = vmatprep.subr.mxu0 0.0
      %986 = vmatpush2.msra.mxu0 0.0
      %987 = vmatprep.subr.mxu0 0.0
      %988 = vmatpush2.msra.mxu0 0.0
      %989 = vmatprep.subr.mxu0 0.0
      %990 = vmatpush2.msra.mxu0 0.0
      %991 = vmatprep.mubr.f32.mxu0 0.0
      %992 = vmatmul.mubr.f32.gmra.mxu0 %v659
      %v993 = vpop.f32.mrf.mxu0
      %v994 = vadd.f32 0.0, %v993
      %v995 = vpop.f32.mrf.mxu0
      %996 = vmatprep.mubr.f32.mxu0 0.0
      %997 = vmatmul.mubr.f32.gmra.mxu0 %v660
      %v998 = vpop.f32.mrf.mxu0
      %v999 = vadd.f32 0.0, %v998
      %v1000 = vpop.f32.mrf.mxu0
      %1001 = vmatprep.mubr.f32.mxu0 0.0
      %1002 = vmatmul.mubr.f32.gmra.mxu0 %v661
      %v1003 = vpop.f32.mrf.mxu0
      %v1004 = vadd.f32 0.0, %v1003
      %v1005 = vpop.f32.mrf.mxu0
      %1006 = vmatprep.mubr.f32.mxu0 0.0
      %1007 = vmatmul.mubr.f32.gmra.mxu0 %v662
      %v1008 = vpop.f32.mrf.mxu0
      %v1009 = vadd.f32 0.0, %v1008
      %v1010 = vpop.f32.mrf.mxu0
      %1011 = vmatprep.mubr.f32.mxu0 0.0
      %1012 = vmatmul.mubr.f32.gmra.mxu0 %v663
      %v1013 = vpop.f32.mrf.mxu0
      %v1014 = vadd.f32 0.0, %v1013
      %v1015 = vpop.f32.mrf.mxu0
      %1016 = vmatprep.mubr.f32.mxu0 0.0
      %1017 = vmatmul.mubr.f32.gmra.mxu0 %v664
      %v1018 = vpop.f32.mrf.mxu0
      %v1019 = vadd.f32 0.0, %v1018
      %v1020 = vpop.f32.mrf.mxu0
      %1021 = vmatprep.mubr.f32.mxu0 0.0
      %1022 = vmatmul.mubr.f32.gmra.mxu0 %v665
      %v1023 = vpop.f32.mrf.mxu0
      %v1024 = vadd.f32 0.0, %v1023
      %v1025 = vpop.f32.mrf.mxu0
      %1026 = vmatprep.mubr.f32.mxu0 0.0
      %1027 = vmatmul.mubr.f32.gmra.mxu0 %v666
      %v1028 = vpop.f32.mrf.mxu0
      %v1029 = vadd.f32 0.0, %v1028
      %v1030 = vpop.f32.mrf.mxu0
      %1031 = vdwg.mxu0
      %v1032 = vadd.f32 %v872, %v994
      %v1033 = vadd.f32 %v877, %v999
      %v1034 = vadd.f32 %v882, %v1004
      %v1035 = vadd.f32 %v887, %v1009
      %v1036 = vadd.f32 %v892, %v1014
      %v1037 = vadd.f32 %v897, %v1019
      %v1038 = vadd.f32 %v902, %v1024
      %v1039 = vadd.f32 %v907, %v1029
      %s1040 = scalar_lea.vmem %s3, 128
      %v1041 = vld [vmem:[%s1040] sm:$0xff]
      %v1042 = vld [vmem:[%s1040 + $0x8] sm:$0xff]
      %v1043 = vld [vmem:[%s1040 + $0x10] sm:$0xff]
      %v1044 = vld [vmem:[%s1040 + $0x18] sm:$0xff]
      %v1045 = vld [vmem:[%s1040 + $0x20] sm:$0xff]
      %v1046 = vld [vmem:[%s1040 + $0x28] sm:$0xff]
      %v1047 = vld [vmem:[%s1040 + $0x30] sm:$0xff]
      %v1048 = vld [vmem:[%s1040 + $0x38] sm:$0xff]
      %v1049 = vld [vmem:[%s1040 + $0x40] sm:$0xff]
      %v1050 = vld [vmem:[%s1040 + $0x48] sm:$0xff]
      %v1051 = vld [vmem:[%s1040 + $0x50] sm:$0xff]
      %v1052 = vld [vmem:[%s1040 + $0x58] sm:$0xff]
      %v1053 = vld [vmem:[%s1040 + $0x60] sm:$0xff]
      %v1054 = vld [vmem:[%s1040 + $0x68] sm:$0xff]
      %v1055 = vld [vmem:[%s1040 + $0x70] sm:$0xff]
      %v1056 = vld [vmem:[%s1040 + $0x78] sm:$0xff]
      %1057 = vmatprep.subr.mxu0 0.0
      %1058 = vmatpush1.msra.mxu0 %v1056
      %1059 = vmatprep.subr.mxu0 0.0
      %1060 = vmatpush1.msra.mxu0 %v1055
      %1061 = vmatprep.subr.mxu0 0.0
      %1062 = vmatpush1.msra.mxu0 %v1054
      %1063 = vmatprep.subr.mxu0 0.0
      %1064 = vmatpush1.msra.mxu0 %v1053
      %1065 = vmatprep.subr.mxu0 0.0
      %1066 = vmatpush1.msra.mxu0 %v1052
      %1067 = vmatprep.subr.mxu0 0.0
      %1068 = vmatpush1.msra.mxu0 %v1051
      %1069 = vmatprep.subr.mxu0 0.0
      %1070 = vmatpush1.msra.mxu0 %v1050
      %1071 = vmatprep.subr.mxu0 0.0
      %1072 = vmatpush1.msra.mxu0 %v1049
      %1073 = vmatprep.subr.mxu0 0.0
      %1074 = vmatpush1.msra.mxu0 %v1048
      %1075 = vmatprep.subr.mxu0 0.0
      %1076 = vmatpush1.msra.mxu0 %v1047
      %1077 = vmatprep.subr.mxu0 0.0
      %1078 = vmatpush1.msra.mxu0 %v1046
      %1079 = vmatprep.subr.mxu0 0.0
      %1080 = vmatpush1.msra.mxu0 %v1045
      %1081 = vmatprep.subr.mxu0 0.0
      %1082 = vmatpush1.msra.mxu0 %v1044
      %1083 = vmatprep.subr.mxu0 0.0
      %1084 = vmatpush1.msra.mxu0 %v1043
      %1085 = vmatprep.subr.mxu0 0.0
      %1086 = vmatpush1.msra.mxu0 %v1042
      %1087 = vmatprep.subr.mxu0 0.0
      %1088 = vmatpush1.msra.mxu0 %v1041
      %1089 = vmatprep.subr.mxu0 0.0
      %1090 = vmatpush2.msra.mxu0 0.0
      %1091 = vmatprep.subr.mxu0 0.0
      %1092 = vmatpush2.msra.mxu0 0.0
      %1093 = vmatprep.subr.mxu0 0.0
      %1094 = vmatpush2.msra.mxu0 0.0
      %1095 = vmatprep.subr.mxu0 0.0
      %1096 = vmatpush2.msra.mxu0 0.0
      %1097 = vmatprep.subr.mxu0 0.0
      %1098 = vmatpush2.msra.mxu0 0.0
      %1099 = vmatprep.subr.mxu0 0.0
      %1100 = vmatpush2.msra.mxu0 0.0
      %1101 = vmatprep.subr.mxu0 0.0
      %1102 = vmatpush2.msra.mxu0 0.0
      %1103 = vmatprep.subr.mxu0 0.0
      %1104 = vmatpush2.msra.mxu0 0.0
      %1105 = vmatprep.subr.mxu0 0.0
      %1106 = vmatpush2.msra.mxu0 0.0
      %1107 = vmatprep.subr.mxu0 0.0
      %1108 = vmatpush2.msra.mxu0 0.0
      %1109 = vmatprep.subr.mxu0 0.0
      %1110 = vmatpush2.msra.mxu0 0.0
      %1111 = vmatprep.subr.mxu0 0.0
      %1112 = vmatpush2.msra.mxu0 0.0
      %1113 = vmatprep.subr.mxu0 0.0
      %1114 = vmatpush2.msra.mxu0 0.0
      %1115 = vmatprep.subr.mxu0 0.0
      %1116 = vmatpush2.msra.mxu0 0.0
      %1117 = vmatprep.subr.mxu0 0.0
      %1118 = vmatpush2.msra.mxu0 0.0
      %1119 = vmatprep.subr.mxu0 0.0
      %1120 = vmatpush2.msra.mxu0 0.0
      %1121 = vmatprep.mubr.f32.mxu0 0.0
      %1122 = vmatmul.mubr.f32.gmra.mxu0 %v558
      %v1123 = vpop.f32.mrf.mxu0
      %v1124 = vadd.f32 0.0, %v1123
      %v1125 = vpop.f32.mrf.mxu0
      %1126 = vmatprep.mubr.f32.mxu0 0.0
      %1127 = vmatmul.mubr.f32.gmra.mxu0 %v559
      %v1128 = vpop.f32.mrf.mxu0
      %v1129 = vadd.f32 0.0, %v1128
      %v1130 = vpop.f32.mrf.mxu0
      %1131 = vmatprep.mubr.f32.mxu0 0.0
      %1132 = vmatmul.mubr.f32.gmra.mxu0 %v560
      %v1133 = vpop.f32.mrf.mxu0
      %v1134 = vadd.f32 0.0, %v1133
      %v1135 = vpop.f32.mrf.mxu0
      %1136 = vmatprep.mubr.f32.mxu0 0.0
      %1137 = vmatmul.mubr.f32.gmra.mxu0 %v561
      %v1138 = vpop.f32.mrf.mxu0
      %v1139 = vadd.f32 0.0, %v1138
      %v1140 = vpop.f32.mrf.mxu0
      %1141 = vmatprep.mubr.f32.mxu0 0.0
      %1142 = vmatmul.mubr.f32.gmra.mxu0 %v562
      %v1143 = vpop.f32.mrf.mxu0
      %v1144 = vadd.f32 0.0, %v1143
      %v1145 = vpop.f32.mrf.mxu0
      %1146 = vmatprep.mubr.f32.mxu0 0.0
      %1147 = vmatmul.mubr.f32.gmra.mxu0 %v563
      %v1148 = vpop.f32.mrf.mxu0
      %v1149 = vadd.f32 0.0, %v1148
      %v1150 = vpop.f32.mrf.mxu0
      %1151 = vmatprep.mubr.f32.mxu0 0.0
      %1152 = vmatmul.mubr.f32.gmra.mxu0 %v564
      %v1153 = vpop.f32.mrf.mxu0
      %v1154 = vadd.f32 0.0, %v1153
      %v1155 = vpop.f32.mrf.mxu0
      %1156 = vmatprep.mubr.f32.mxu0 0.0
      %1157 = vmatmul.mubr.f32.gmra.mxu0 %v565
      %v1158 = vpop.f32.mrf.mxu0
      %v1159 = vadd.f32 0.0, %v1158
      %v1160 = vpop.f32.mrf.mxu0
      %1161 = vdwg.mxu0
      %v1162 = vadd.f32 %v1032, %v1124
      %v1163 = vadd.f32 %v1033, %v1129
      %v1164 = vadd.f32 %v1034, %v1134
      %v1165 = vadd.f32 %v1035, %v1139
      %v1166 = vadd.f32 %v1036, %v1144
      %v1167 = vadd.f32 %v1037, %v1149
      %v1168 = vadd.f32 %v1038, %v1154
      %v1169 = vadd.f32 %v1039, %v1159
      %s1170 = scalar_lea.vmem %s3, 512
      %v1171 = vld [vmem:[%s1170] sm:$0xff]
      %v1172 = vld [vmem:[%s1170 + $0x8] sm:$0xff]
      %v1173 = vld [vmem:[%s1170 + $0x10] sm:$0xff]
      %v1174 = vld [vmem:[%s1170 + $0x18] sm:$0xff]
      %v1175 = vld [vmem:[%s1170 + $0x20] sm:$0xff]
      %v1176 = vld [vmem:[%s1170 + $0x28] sm:$0xff]
      %v1177 = vld [vmem:[%s1170 + $0x30] sm:$0xff]
      %v1178 = vld [vmem:[%s1170 + $0x38] sm:$0xff]
      %v1179 = vld [vmem:[%s1170 + $0x40] sm:$0xff]
      %v1180 = vld [vmem:[%s1170 + $0x48] sm:$0xff]
      %v1181 = vld [vmem:[%s1170 + $0x50] sm:$0xff]
      %v1182 = vld [vmem:[%s1170 + $0x58] sm:$0xff]
      %v1183 = vld [vmem:[%s1170 + $0x60] sm:$0xff]
      %v1184 = vld [vmem:[%s1170 + $0x68] sm:$0xff]
      %v1185 = vld [vmem:[%s1170 + $0x70] sm:$0xff]
      %v1186 = vld [vmem:[%s1170 + $0x78] sm:$0xff]
      %1187 = vmatprep.subr.mxu0 0.0
      %1188 = vmatpush1.msra.mxu0 %v1186
      %1189 = vmatprep.subr.mxu0 0.0
      %1190 = vmatpush1.msra.mxu0 %v1185
      %1191 = vmatprep.subr.mxu0 0.0
      %1192 = vmatpush1.msra.mxu0 %v1184
      %1193 = vmatprep.subr.mxu0 0.0
      %1194 = vmatpush1.msra.mxu0 %v1183
      %1195 = vmatprep.subr.mxu0 0.0
      %1196 = vmatpush1.msra.mxu0 %v1182
      %1197 = vmatprep.subr.mxu0 0.0
      %1198 = vmatpush1.msra.mxu0 %v1181
      %1199 = vmatprep.subr.mxu0 0.0
      %1200 = vmatpush1.msra.mxu0 %v1180
      %1201 = vmatprep.subr.mxu0 0.0
      %1202 = vmatpush1.msra.mxu0 %v1179
      %1203 = vmatprep.subr.mxu0 0.0
      %1204 = vmatpush1.msra.mxu0 %v1178
      %1205 = vmatprep.subr.mxu0 0.0
      %1206 = vmatpush1.msra.mxu0 %v1177
      %1207 = vmatprep.subr.mxu0 0.0
      %1208 = vmatpush1.msra.mxu0 %v1176
      %1209 = vmatprep.subr.mxu0 0.0
      %1210 = vmatpush1.msra.mxu0 %v1175
      %1211 = vmatprep.subr.mxu0 0.0
      %1212 = vmatpush1.msra.mxu0 %v1174
      %1213 = vmatprep.subr.mxu0 0.0
      %1214 = vmatpush1.msra.mxu0 %v1173
      %1215 = vmatprep.subr.mxu0 0.0
      %1216 = vmatpush1.msra.mxu0 %v1172
      %1217 = vmatprep.subr.mxu0 0.0
      %1218 = vmatpush1.msra.mxu0 %v1171
      %1219 = vmatprep.subr.mxu0 0.0
      %1220 = vmatpush2.msra.mxu0 0.0
      %1221 = vmatprep.subr.mxu0 0.0
      %1222 = vmatpush2.msra.mxu0 0.0
      %1223 = vmatprep.subr.mxu0 0.0
      %1224 = vmatpush2.msra.mxu0 0.0
      %1225 = vmatprep.subr.mxu0 0.0
      %1226 = vmatpush2.msra.mxu0 0.0
      %1227 = vmatprep.subr.mxu0 0.0
      %1228 = vmatpush2.msra.mxu0 0.0
      %1229 = vmatprep.subr.mxu0 0.0
      %1230 = vmatpush2.msra.mxu0 0.0
      %1231 = vmatprep.subr.mxu0 0.0
      %1232 = vmatpush2.msra.mxu0 0.0
      %1233 = vmatprep.subr.mxu0 0.0
      %1234 = vmatpush2.msra.mxu0 0.0
      %1235 = vmatprep.subr.mxu0 0.0
      %1236 = vmatpush2.msra.mxu0 0.0
      %1237 = vmatprep.subr.mxu0 0.0
      %1238 = vmatpush2.msra.mxu0 0.0
      %1239 = vmatprep.subr.mxu0 0.0
      %1240 = vmatpush2.msra.mxu0 0.0
      %1241 = vmatprep.subr.mxu0 0.0
      %1242 = vmatpush2.msra.mxu0 0.0
      %1243 = vmatprep.subr.mxu0 0.0
      %1244 = vmatpush2.msra.mxu0 0.0
      %1245 = vmatprep.subr.mxu0 0.0
      %1246 = vmatpush2.msra.mxu0 0.0
      %1247 = vmatprep.subr.mxu0 0.0
      %1248 = vmatpush2.msra.mxu0 0.0
      %1249 = vmatprep.subr.mxu0 0.0
      %1250 = vmatpush2.msra.mxu0 0.0
      %1251 = vmatprep.mubr.f32.mxu0 0.0
      %1252 = vmatmul.mubr.f32.gmra.mxu0 %v560
      %v1253 = vpop.f32.mrf.mxu0
      %v1254 = vadd.f32 0.0, %v1253
      %v1255 = vpop.f32.mrf.mxu0
      %1256 = vmatprep.mubr.f32.mxu0 0.0
      %1257 = vmatmul.mubr.f32.gmra.mxu0 %v561
      %v1258 = vpop.f32.mrf.mxu0
      %v1259 = vadd.f32 0.0, %v1258
      %v1260 = vpop.f32.mrf.mxu0
      %1261 = vmatprep.mubr.f32.mxu0 0.0
      %1262 = vmatmul.mubr.f32.gmra.mxu0 %v562
      %v1263 = vpop.f32.mrf.mxu0
      %v1264 = vadd.f32 0.0, %v1263
      %v1265 = vpop.f32.mrf.mxu0
      %1266 = vmatprep.mubr.f32.mxu0 0.0
      %1267 = vmatmul.mubr.f32.gmra.mxu0 %v563
      %v1268 = vpop.f32.mrf.mxu0
      %v1269 = vadd.f32 0.0, %v1268
      %v1270 = vpop.f32.mrf.mxu0
      %1271 = vmatprep.mubr.f32.mxu0 0.0
      %1272 = vmatmul.mubr.f32.gmra.mxu0 %v564
      %v1273 = vpop.f32.mrf.mxu0
      %v1274 = vadd.f32 0.0, %v1273
      %v1275 = vpop.f32.mrf.mxu0
      %1276 = vmatprep.mubr.f32.mxu0 0.0
      %1277 = vmatmul.mubr.f32.gmra.mxu0 %v565
      %v1278 = vpop.f32.mrf.mxu0
      %v1279 = vadd.f32 0.0, %v1278
      %v1280 = vpop.f32.mrf.mxu0
      %1281 = vmatprep.mubr.f32.mxu0 0.0
      %1282 = vmatmul.mubr.f32.gmra.mxu0 %v566
      %v1283 = vpop.f32.mrf.mxu0
      %v1284 = vadd.f32 0.0, %v1283
      %v1285 = vpop.f32.mrf.mxu0
      %1286 = vmatprep.mubr.f32.mxu0 0.0
      %1287 = vmatmul.mubr.f32.gmra.mxu0 %v567
      %v1288 = vpop.f32.mrf.mxu0
      %v1289 = vadd.f32 0.0, %v1288
      %v1290 = vpop.f32.mrf.mxu0
      %1291 = vdwg.mxu0
      %v1292 = vadd.f32 %v1162, %v1254
      %v1293 = vadd.f32 %v1163, %v1259
      %v1294 = vadd.f32 %v1164, %v1264
      %v1295 = vadd.f32 %v1165, %v1269
      %v1296 = vadd.f32 %v1166, %v1274
      %v1297 = vadd.f32 %v1167, %v1279
      %v1298 = vadd.f32 %v1168, %v1284
      %v1299 = vadd.f32 %v1169, %v1289
      %s1300 = scalar_lea.vmem %s3, 896
      %v1301 = vld [vmem:[%s1300] sm:$0xff]
      %v1302 = vld [vmem:[%s1300 + $0x8] sm:$0xff]
      %v1303 = vld [vmem:[%s1300 + $0x10] sm:$0xff]
      %v1304 = vld [vmem:[%s1300 + $0x18] sm:$0xff]
      %v1305 = vld [vmem:[%s1300 + $0x20] sm:$0xff]
      %v1306 = vld [vmem:[%s1300 + $0x28] sm:$0xff]
      %v1307 = vld [vmem:[%s1300 + $0x30] sm:$0xff]
      %v1308 = vld [vmem:[%s1300 + $0x38] sm:$0xff]
      %v1309 = vld [vmem:[%s1300 + $0x40] sm:$0xff]
      %v1310 = vld [vmem:[%s1300 + $0x48] sm:$0xff]
      %v1311 = vld [vmem:[%s1300 + $0x50] sm:$0xff]
      %v1312 = vld [vmem:[%s1300 + $0x58] sm:$0xff]
      %v1313 = vld [vmem:[%s1300 + $0x60] sm:$0xff]
      %v1314 = vld [vmem:[%s1300 + $0x68] sm:$0xff]
      %v1315 = vld [vmem:[%s1300 + $0x70] sm:$0xff]
      %v1316 = vld [vmem:[%s1300 + $0x78] sm:$0xff]
      %1317 = vmatprep.subr.mxu0 0.0
      %1318 = vmatpush1.msra.mxu0 %v1316
      %1319 = vmatprep.subr.mxu0 0.0
      %1320 = vmatpush1.msra.mxu0 %v1315
      %1321 = vmatprep.subr.mxu0 0.0
      %1322 = vmatpush1.msra.mxu0 %v1314
      %1323 = vmatprep.subr.mxu0 0.0
      %1324 = vmatpush1.msra.mxu0 %v1313
      %1325 = vmatprep.subr.mxu0 0.0
      %1326 = vmatpush1.msra.mxu0 %v1312
      %1327 = vmatprep.subr.mxu0 0.0
      %1328 = vmatpush1.msra.mxu0 %v1311
      %1329 = vmatprep.subr.mxu0 0.0
      %1330 = vmatpush1.msra.mxu0 %v1310
      %1331 = vmatprep.subr.mxu0 0.0
      %1332 = vmatpush1.msra.mxu0 %v1309
      %1333 = vmatprep.subr.mxu0 0.0
      %1334 = vmatpush1.msra.mxu0 %v1308
      %1335 = vmatprep.subr.mxu0 0.0
      %1336 = vmatpush1.msra.mxu0 %v1307
      %1337 = vmatprep.subr.mxu0 0.0
      %1338 = vmatpush1.msra.mxu0 %v1306
      %1339 = vmatprep.subr.mxu0 0.0
      %1340 = vmatpush1.msra.mxu0 %v1305
      %1341 = vmatprep.subr.mxu0 0.0
      %1342 = vmatpush1.msra.mxu0 %v1304
      %1343 = vmatprep.subr.mxu0 0.0
      %1344 = vmatpush1.msra.mxu0 %v1303
      %1345 = vmatprep.subr.mxu0 0.0
      %1346 = vmatpush1.msra.mxu0 %v1302
      %1347 = vmatprep.subr.mxu0 0.0
      %1348 = vmatpush1.msra.mxu0 %v1301
      %1349 = vmatprep.subr.mxu0 0.0
      %1350 = vmatpush2.msra.mxu0 0.0
      %1351 = vmatprep.subr.mxu0 0.0
      %1352 = vmatpush2.msra.mxu0 0.0
      %1353 = vmatprep.subr.mxu0 0.0
      %1354 = vmatpush2.msra.mxu0 0.0
      %1355 = vmatprep.subr.mxu0 0.0
      %1356 = vmatpush2.msra.mxu0 0.0
      %1357 = vmatprep.subr.mxu0 0.0
      %1358 = vmatpush2.msra.mxu0 0.0
      %1359 = vmatprep.subr.mxu0 0.0
      %1360 = vmatpush2.msra.mxu0 0.0
      %1361 = vmatprep.subr.mxu0 0.0
      %1362 = vmatpush2.msra.mxu0 0.0
      %1363 = vmatprep.subr.mxu0 0.0
      %1364 = vmatpush2.msra.mxu0 0.0
      %1365 = vmatprep.subr.mxu0 0.0
      %1366 = vmatpush2.msra.mxu0 0.0
      %1367 = vmatprep.subr.mxu0 0.0
      %1368 = vmatpush2.msra.mxu0 0.0
      %1369 = vmatprep.subr.mxu0 0.0
      %1370 = vmatpush2.msra.mxu0 0.0
      %1371 = vmatprep.subr.mxu0 0.0
      %1372 = vmatpush2.msra.mxu0 0.0
      %1373 = vmatprep.subr.mxu0 0.0
      %1374 = vmatpush2.msra.mxu0 0.0
      %1375 = vmatprep.subr.mxu0 0.0
      %1376 = vmatpush2.msra.mxu0 0.0
      %1377 = vmatprep.subr.mxu0 0.0
      %1378 = vmatpush2.msra.mxu0 0.0
      %1379 = vmatprep.subr.mxu0 0.0
      %1380 = vmatpush2.msra.mxu0 0.0
      %1381 = vmatprep.mubr.f32.mxu0 0.0
      %1382 = vmatmul.mubr.f32.gmra.mxu0 %v562
      %v1383 = vpop.f32.mrf.mxu0
      %v1384 = vadd.f32 0.0, %v1383
      %v1385 = vpop.f32.mrf.mxu0
      %1386 = vmatprep.mubr.f32.mxu0 0.0
      %1387 = vmatmul.mubr.f32.gmra.mxu0 %v563
      %v1388 = vpop.f32.mrf.mxu0
      %v1389 = vadd.f32 0.0, %v1388
      %v1390 = vpop.f32.mrf.mxu0
      %1391 = vmatprep.mubr.f32.mxu0 0.0
      %1392 = vmatmul.mubr.f32.gmra.mxu0 %v564
      %v1393 = vpop.f32.mrf.mxu0
      %v1394 = vadd.f32 0.0, %v1393
      %v1395 = vpop.f32.mrf.mxu0
      %1396 = vmatprep.mubr.f32.mxu0 0.0
      %1397 = vmatmul.mubr.f32.gmra.mxu0 %v565
      %v1398 = vpop.f32.mrf.mxu0
      %v1399 = vadd.f32 0.0, %v1398
      %v1400 = vpop.f32.mrf.mxu0
      %1401 = vmatprep.mubr.f32.mxu0 0.0
      %1402 = vmatmul.mubr.f32.gmra.mxu0 %v566
      %v1403 = vpop.f32.mrf.mxu0
      %v1404 = vadd.f32 0.0, %v1403
      %v1405 = vpop.f32.mrf.mxu0
      %1406 = vmatprep.mubr.f32.mxu0 0.0
      %1407 = vmatmul.mubr.f32.gmra.mxu0 %v567
      %v1408 = vpop.f32.mrf.mxu0
      %v1409 = vadd.f32 0.0, %v1408
      %v1410 = vpop.f32.mrf.mxu0
      %1411 = vmatprep.mubr.f32.mxu0 0.0
      %1412 = vmatmul.mubr.f32.gmra.mxu0 %v568
      %v1413 = vpop.f32.mrf.mxu0
      %v1414 = vadd.f32 0.0, %v1413
      %v1415 = vpop.f32.mrf.mxu0
      %1416 = vmatprep.mubr.f32.mxu0 0.0
      %1417 = vmatmul.mubr.f32.gmra.mxu0 %v569
      %v1418 = vpop.f32.mrf.mxu0
      %v1419 = vadd.f32 0.0, %v1418
      %v1420 = vpop.f32.mrf.mxu0
      %1421 = vdwg.mxu0
      %v1422 = vadd.f32 %v1292, %v1384
      %v1423 = vadd.f32 %v1293, %v1389
      %v1424 = vadd.f32 %v1294, %v1394
      %v1425 = vadd.f32 %v1295, %v1399
      %v1426 = vadd.f32 %v1296, %v1404
      %v1427 = vadd.f32 %v1297, %v1409
      %v1428 = vadd.f32 %v1298, %v1414
      %v1429 = vadd.f32 %v1299, %v1419
      %v1430 = vrot.slane %v558, 1
      %v1431 = vrot.slane %v559, 1
      %v1432 = vrot.slane %v560, 1
      %v1433 = vrot.slane %v561, 1
      %v1434 = vrot.slane %v562, 1
      %v1435 = vrot.slane %v563, 1
      %v1436 = vrot.slane %v564, 1
      %v1437 = vrot.slane %v565, 1
      %v1438 = vrot.slane %v566, 1
      %v1439 = vrot.slane %v567, 1
      %v1440 = vrot.slane %v568, 1
      %v1441 = vrot.slane %v569, 1
      %vm1442 = vcmp.lt.s32.totalorder %v480, 7
      %v1443 = vsel %vm1442, %v1440, %v1441
      %v1444 = vsel %vm1442, %v1439, %v1440
      %v1445 = vsel %vm1442, %v1438, %v1439
      %v1446 = vsel %vm1442, %v1437, %v1438
      %v1447 = vsel %vm1442, %v1436, %v1437
      %v1448 = vsel %vm1442, %v1435, %v1436
      %v1449 = vsel %vm1442, %v1434, %v1435
      %v1450 = vsel %vm1442, %v1433, %v1434
      %v1451 = vsel %vm1442, %v1432, %v1433
      %v1452 = vsel %vm1442, %v1431, %v1432
      %v1453 = vsel %vm1442, %v1430, %v1431
      %v1454 = vsel %vm1442, %v1441, %v1430
      %v1455 = vsel %vm594, 1, 0
      %v1456 = vsel %vm595, 1, 0
      %v1457 = vsel %vm596, 1, 0
      %v1458 = vsel %vm597, 1, 0
      %v1459 = vsel %vm598, 1, 0
      %v1460 = vsel %vm599, 1, 0
      %v1461 = vsel %vm600, 1, 0
      %v1462 = vsel %vm601, 1, 0
      %v1463 = vsel %vm602, 1, 0
      %v1464 = vsel %vm603, 1, 0
      %v1465 = vsel %vm604, 1, 0
      %v1466 = vsel %vm605, 1, 0
      %vm1467 = vcmp.eq.s32.totalorder %v1455, 1
      %vm1468 = vcmp.eq.s32.totalorder %v1456, 1
      %vm1469 = vcmp.eq.s32.totalorder %v1457, 1
      %vm1470 = vcmp.eq.s32.totalorder %v1458, 1
      %vm1471 = vcmp.eq.s32.totalorder %v1459, 1
      %vm1472 = vcmp.eq.s32.totalorder %v1460, 1
      %vm1473 = vcmp.eq.s32.totalorder %v1461, 1
      %vm1474 = vcmp.eq.s32.totalorder %v1462, 1
      %vm1475 = vcmp.eq.s32.totalorder %v1463, 1
      %vm1476 = vcmp.eq.s32.totalorder %v1464, 1
      %vm1477 = vcmp.eq.s32.totalorder %v1465, 1
      %vm1478 = vcmp.eq.s32.totalorder %v1466, 1
      %v1479 = vsel %vm1467, 0.0, %v1453
      %v1480 = vsel %vm1468, 0.0, %v1452
      %v1481 = vsel %vm1469, 0.0, %v1451
      %v1482 = vsel %vm1470, 0.0, %v1450
      %v1483 = vsel %vm1471, 0.0, %v1449
      %v1484 = vsel %vm1472, 0.0, %v1448
      %v1485 = vsel %vm1473, 0.0, %v1447
      %v1486 = vsel %vm1474, 0.0, %v1446
      %v1487 = vsel %vm1475, 0.0, %v1445
      %v1488 = vsel %vm1476, 0.0, %v1444
      %v1489 = vsel %vm1477, 0.0, %v1443
      %v1490 = vsel %vm1478, 0.0, %v1454
      %s1491 = scalar_lea.vmem %s3, 256
      %v1492 = vld [vmem:[%s1491] sm:$0xff]
      %v1493 = vld [vmem:[%s1491 + $0x8] sm:$0xff]
      %v1494 = vld [vmem:[%s1491 + $0x10] sm:$0xff]
      %v1495 = vld [vmem:[%s1491 + $0x18] sm:$0xff]
      %v1496 = vld [vmem:[%s1491 + $0x20] sm:$0xff]
      %v1497 = vld [vmem:[%s1491 + $0x28] sm:$0xff]
      %v1498 = vld [vmem:[%s1491 + $0x30] sm:$0xff]
      %v1499 = vld [vmem:[%s1491 + $0x38] sm:$0xff]
      %v1500 = vld [vmem:[%s1491 + $0x40] sm:$0xff]
      %v1501 = vld [vmem:[%s1491 + $0x48] sm:$0xff]
      %v1502 = vld [vmem:[%s1491 + $0x50] sm:$0xff]
      %v1503 = vld [vmem:[%s1491 + $0x58] sm:$0xff]
      %v1504 = vld [vmem:[%s1491 + $0x60] sm:$0xff]
      %v1505 = vld [vmem:[%s1491 + $0x68] sm:$0xff]
      %v1506 = vld [vmem:[%s1491 + $0x70] sm:$0xff]
      %v1507 = vld [vmem:[%s1491 + $0x78] sm:$0xff]
      %1508 = vmatprep.subr.mxu0 0.0
      %1509 = vmatpush1.msra.mxu0 %v1507
      %1510 = vmatprep.subr.mxu0 0.0
      %1511 = vmatpush1.msra.mxu0 %v1506
      %1512 = vmatprep.subr.mxu0 0.0
      %1513 = vmatpush1.msra.mxu0 %v1505
      %1514 = vmatprep.subr.mxu0 0.0
      %1515 = vmatpush1.msra.mxu0 %v1504
      %1516 = vmatprep.subr.mxu0 0.0
      %1517 = vmatpush1.msra.mxu0 %v1503
      %1518 = vmatprep.subr.mxu0 0.0
      %1519 = vmatpush1.msra.mxu0 %v1502
      %1520 = vmatprep.subr.mxu0 0.0
      %1521 = vmatpush1.msra.mxu0 %v1501
      %1522 = vmatprep.subr.mxu0 0.0
      %1523 = vmatpush1.msra.mxu0 %v1500
      %1524 = vmatprep.subr.mxu0 0.0
      %1525 = vmatpush1.msra.mxu0 %v1499
      %1526 = vmatprep.subr.mxu0 0.0
      %1527 = vmatpush1.msra.mxu0 %v1498
      %1528 = vmatprep.subr.mxu0 0.0
      %1529 = vmatpush1.msra.mxu0 %v1497
      %1530 = vmatprep.subr.mxu0 0.0
      %1531 = vmatpush1.msra.mxu0 %v1496
      %1532 = vmatprep.subr.mxu0 0.0
      %1533 = vmatpush1.msra.mxu0 %v1495
      %1534 = vmatprep.subr.mxu0 0.0
      %1535 = vmatpush1.msra.mxu0 %v1494
      %1536 = vmatprep.subr.mxu0 0.0
      %1537 = vmatpush1.msra.mxu0 %v1493
      %1538 = vmatprep.subr.mxu0 0.0
      %1539 = vmatpush1.msra.mxu0 %v1492
      %1540 = vmatprep.subr.mxu0 0.0
      %1541 = vmatpush2.msra.mxu0 0.0
      %1542 = vmatprep.subr.mxu0 0.0
      %1543 = vmatpush2.msra.mxu0 0.0
      %1544 = vmatprep.subr.mxu0 0.0
      %1545 = vmatpush2.msra.mxu0 0.0
      %1546 = vmatprep.subr.mxu0 0.0
      %1547 = vmatpush2.msra.mxu0 0.0
      %1548 = vmatprep.subr.mxu0 0.0
      %1549 = vmatpush2.msra.mxu0 0.0
      %1550 = vmatprep.subr.mxu0 0.0
      %1551 = vmatpush2.msra.mxu0 0.0
      %1552 = vmatprep.subr.mxu0 0.0
      %1553 = vmatpush2.msra.mxu0 0.0
      %1554 = vmatprep.subr.mxu0 0.0
      %1555 = vmatpush2.msra.mxu0 0.0
      %1556 = vmatprep.subr.mxu0 0.0
      %1557 = vmatpush2.msra.mxu0 0.0
      %1558 = vmatprep.subr.mxu0 0.0
      %1559 = vmatpush2.msra.mxu0 0.0
      %1560 = vmatprep.subr.mxu0 0.0
      %1561 = vmatpush2.msra.mxu0 0.0
      %1562 = vmatprep.subr.mxu0 0.0
      %1563 = vmatpush2.msra.mxu0 0.0
      %1564 = vmatprep.subr.mxu0 0.0
      %1565 = vmatpush2.msra.mxu0 0.0
      %1566 = vmatprep.subr.mxu0 0.0
      %1567 = vmatpush2.msra.mxu0 0.0
      %1568 = vmatprep.subr.mxu0 0.0
      %1569 = vmatpush2.msra.mxu0 0.0
      %1570 = vmatprep.subr.mxu0 0.0
      %1571 = vmatpush2.msra.mxu0 0.0
      %1572 = vmatprep.mubr.f32.mxu0 0.0
      %1573 = vmatmul.mubr.f32.gmra.mxu0 %v1479
      %v1574 = vpop.f32.mrf.mxu0
      %v1575 = vadd.f32 0.0, %v1574
      %v1576 = vpop.f32.mrf.mxu0
      %1577 = vmatprep.mubr.f32.mxu0 0.0
      %1578 = vmatmul.mubr.f32.gmra.mxu0 %v1480
      %v1579 = vpop.f32.mrf.mxu0
      %v1580 = vadd.f32 0.0, %v1579
      %v1581 = vpop.f32.mrf.mxu0
      %1582 = vmatprep.mubr.f32.mxu0 0.0
      %1583 = vmatmul.mubr.f32.gmra.mxu0 %v1481
      %v1584 = vpop.f32.mrf.mxu0
      %v1585 = vadd.f32 0.0, %v1584
      %v1586 = vpop.f32.mrf.mxu0
      %1587 = vmatprep.mubr.f32.mxu0 0.0
      %1588 = vmatmul.mubr.f32.gmra.mxu0 %v1482
      %v1589 = vpop.f32.mrf.mxu0
      %v1590 = vadd.f32 0.0, %v1589
      %v1591 = vpop.f32.mrf.mxu0
      %1592 = vmatprep.mubr.f32.mxu0 0.0
      %1593 = vmatmul.mubr.f32.gmra.mxu0 %v1483
      %v1594 = vpop.f32.mrf.mxu0
      %v1595 = vadd.f32 0.0, %v1594
      %v1596 = vpop.f32.mrf.mxu0
      %1597 = vmatprep.mubr.f32.mxu0 0.0
      %1598 = vmatmul.mubr.f32.gmra.mxu0 %v1484
      %v1599 = vpop.f32.mrf.mxu0
      %v1600 = vadd.f32 0.0, %v1599
      %v1601 = vpop.f32.mrf.mxu0
      %1602 = vmatprep.mubr.f32.mxu0 0.0
      %1603 = vmatmul.mubr.f32.gmra.mxu0 %v1485
      %v1604 = vpop.f32.mrf.mxu0
      %v1605 = vadd.f32 0.0, %v1604
      %v1606 = vpop.f32.mrf.mxu0
      %1607 = vmatprep.mubr.f32.mxu0 0.0
      %1608 = vmatmul.mubr.f32.gmra.mxu0 %v1486
      %v1609 = vpop.f32.mrf.mxu0
      %v1610 = vadd.f32 0.0, %v1609
      %v1611 = vpop.f32.mrf.mxu0
      %1612 = vdwg.mxu0
      %v1613 = vadd.f32 %v1422, %v1575
      %v1614 = vadd.f32 %v1423, %v1580
      %v1615 = vadd.f32 %v1424, %v1585
      %v1616 = vadd.f32 %v1425, %v1590
      %v1617 = vadd.f32 %v1426, %v1595
      %v1618 = vadd.f32 %v1427, %v1600
      %v1619 = vadd.f32 %v1428, %v1605
      %v1620 = vadd.f32 %v1429, %v1610
      %s1621 = scalar_lea.vmem %s3, 640
      %v1622 = vld [vmem:[%s1621] sm:$0xff]
      %v1623 = vld [vmem:[%s1621 + $0x8] sm:$0xff]
      %v1624 = vld [vmem:[%s1621 + $0x10] sm:$0xff]
      %v1625 = vld [vmem:[%s1621 + $0x18] sm:$0xff]
      %v1626 = vld [vmem:[%s1621 + $0x20] sm:$0xff]
      %v1627 = vld [vmem:[%s1621 + $0x28] sm:$0xff]
      %v1628 = vld [vmem:[%s1621 + $0x30] sm:$0xff]
      %v1629 = vld [vmem:[%s1621 + $0x38] sm:$0xff]
      %v1630 = vld [vmem:[%s1621 + $0x40] sm:$0xff]
      %v1631 = vld [vmem:[%s1621 + $0x48] sm:$0xff]
      %v1632 = vld [vmem:[%s1621 + $0x50] sm:$0xff]
      %v1633 = vld [vmem:[%s1621 + $0x58] sm:$0xff]
      %v1634 = vld [vmem:[%s1621 + $0x60] sm:$0xff]
      %v1635 = vld [vmem:[%s1621 + $0x68] sm:$0xff]
      %v1636 = vld [vmem:[%s1621 + $0x70] sm:$0xff]
      %v1637 = vld [vmem:[%s1621 + $0x78] sm:$0xff]
      %1638 = vmatprep.subr.mxu0 0.0
      %1639 = vmatpush1.msra.mxu0 %v1637
      %1640 = vmatprep.subr.mxu0 0.0
      %1641 = vmatpush1.msra.mxu0 %v1636
      %1642 = vmatprep.subr.mxu0 0.0
      %1643 = vmatpush1.msra.mxu0 %v1635
      %1644 = vmatprep.subr.mxu0 0.0
      %1645 = vmatpush1.msra.mxu0 %v1634
      %1646 = vmatprep.subr.mxu0 0.0
      %1647 = vmatpush1.msra.mxu0 %v1633
      %1648 = vmatprep.subr.mxu0 0.0
      %1649 = vmatpush1.msra.mxu0 %v1632
      %1650 = vmatprep.subr.mxu0 0.0
      %1651 = vmatpush1.msra.mxu0 %v1631
      %1652 = vmatprep.subr.mxu0 0.0
      %1653 = vmatpush1.msra.mxu0 %v1630
      %1654 = vmatprep.subr.mxu0 0.0
      %1655 = vmatpush1.msra.mxu0 %v1629
      %1656 = vmatprep.subr.mxu0 0.0
      %1657 = vmatpush1.msra.mxu0 %v1628
      %1658 = vmatprep.subr.mxu0 0.0
      %1659 = vmatpush1.msra.mxu0 %v1627
      %1660 = vmatprep.subr.mxu0 0.0
      %1661 = vmatpush1.msra.mxu0 %v1626
      %1662 = vmatprep.subr.mxu0 0.0
      %1663 = vmatpush1.msra.mxu0 %v1625
      %1664 = vmatprep.subr.mxu0 0.0
      %1665 = vmatpush1.msra.mxu0 %v1624
      %1666 = vmatprep.subr.mxu0 0.0
      %1667 = vmatpush1.msra.mxu0 %v1623
      %1668 = vmatprep.subr.mxu0 0.0
      %1669 = vmatpush1.msra.mxu0 %v1622
      %1670 = vmatprep.subr.mxu0 0.0
      %1671 = vmatpush2.msra.mxu0 0.0
      %1672 = vmatprep.subr.mxu0 0.0
      %1673 = vmatpush2.msra.mxu0 0.0
      %1674 = vmatprep.subr.mxu0 0.0
      %1675 = vmatpush2.msra.mxu0 0.0
      %1676 = vmatprep.subr.mxu0 0.0
      %1677 = vmatpush2.msra.mxu0 0.0
      %1678 = vmatprep.subr.mxu0 0.0
      %1679 = vmatpush2.msra.mxu0 0.0
      %1680 = vmatprep.subr.mxu0 0.0
      %1681 = vmatpush2.msra.mxu0 0.0
      %1682 = vmatprep.subr.mxu0 0.0
      %1683 = vmatpush2.msra.mxu0 0.0
      %1684 = vmatprep.subr.mxu0 0.0
      %1685 = vmatpush2.msra.mxu0 0.0
      %1686 = vmatprep.subr.mxu0 0.0
      %1687 = vmatpush2.msra.mxu0 0.0
      %1688 = vmatprep.subr.mxu0 0.0
      %1689 = vmatpush2.msra.mxu0 0.0
      %1690 = vmatprep.subr.mxu0 0.0
      %1691 = vmatpush2.msra.mxu0 0.0
      %1692 = vmatprep.subr.mxu0 0.0
      %1693 = vmatpush2.msra.mxu0 0.0
      %1694 = vmatprep.subr.mxu0 0.0
      %1695 = vmatpush2.msra.mxu0 0.0
      %1696 = vmatprep.subr.mxu0 0.0
      %1697 = vmatpush2.msra.mxu0 0.0
      %1698 = vmatprep.subr.mxu0 0.0
      %1699 = vmatpush2.msra.mxu0 0.0
      %1700 = vmatprep.subr.mxu0 0.0
      %1701 = vmatpush2.msra.mxu0 0.0
      %1702 = vmatprep.mubr.f32.mxu0 0.0
      %1703 = vmatmul.mubr.f32.gmra.mxu0 %v1481
      %v1704 = vpop.f32.mrf.mxu0
      %v1705 = vadd.f32 0.0, %v1704
      %v1706 = vpop.f32.mrf.mxu0
      %1707 = vmatprep.mubr.f32.mxu0 0.0
      %1708 = vmatmul.mubr.f32.gmra.mxu0 %v1482
      %v1709 = vpop.f32.mrf.mxu0
      %v1710 = vadd.f32 0.0, %v1709
      %v1711 = vpop.f32.mrf.mxu0
      %1712 = vmatprep.mubr.f32.mxu0 0.0
      %1713 = vmatmul.mubr.f32.gmra.mxu0 %v1483
      %v1714 = vpop.f32.mrf.mxu0
      %v1715 = vadd.f32 0.0, %v1714
      %v1716 = vpop.f32.mrf.mxu0
      %1717 = vmatprep.mubr.f32.mxu0 0.0
      %1718 = vmatmul.mubr.f32.gmra.mxu0 %v1484
      %v1719 = vpop.f32.mrf.mxu0
      %v1720 = vadd.f32 0.0, %v1719
      %v1721 = vpop.f32.mrf.mxu0
      %1722 = vmatprep.mubr.f32.mxu0 0.0
      %1723 = vmatmul.mubr.f32.gmra.mxu0 %v1485
      %v1724 = vpop.f32.mrf.mxu0
      %v1725 = vadd.f32 0.0, %v1724
      %v1726 = vpop.f32.mrf.mxu0
      %1727 = vmatprep.mubr.f32.mxu0 0.0
      %1728 = vmatmul.mubr.f32.gmra.mxu0 %v1486
      %v1729 = vpop.f32.mrf.mxu0
      %v1730 = vadd.f32 0.0, %v1729
      %v1731 = vpop.f32.mrf.mxu0
      %1732 = vmatprep.mubr.f32.mxu0 0.0
      %1733 = vmatmul.mubr.f32.gmra.mxu0 %v1487
      %v1734 = vpop.f32.mrf.mxu0
      %v1735 = vadd.f32 0.0, %v1734
      %v1736 = vpop.f32.mrf.mxu0
      %1737 = vmatprep.mubr.f32.mxu0 0.0
      %1738 = vmatmul.mubr.f32.gmra.mxu0 %v1488
      %v1739 = vpop.f32.mrf.mxu0
      %v1740 = vadd.f32 0.0, %v1739
      %v1741 = vpop.f32.mrf.mxu0
      %1742 = vdwg.mxu0
      %v1743 = vadd.f32 %v1613, %v1705
      %v1744 = vadd.f32 %v1614, %v1710
      %v1745 = vadd.f32 %v1615, %v1715
      %v1746 = vadd.f32 %v1616, %v1720
      %v1747 = vadd.f32 %v1617, %v1725
      %v1748 = vadd.f32 %v1618, %v1730
      %v1749 = vadd.f32 %v1619, %v1735
      %v1750 = vadd.f32 %v1620, %v1740
      %s1751 = scalar_lea.vmem %s3, 1024
      %v1752 = vld [vmem:[%s1751] sm:$0xff]
      %v1753 = vld [vmem:[%s1751 + $0x8] sm:$0xff]
      %v1754 = vld [vmem:[%s1751 + $0x10] sm:$0xff]
      %v1755 = vld [vmem:[%s1751 + $0x18] sm:$0xff]
      %v1756 = vld [vmem:[%s1751 + $0x20] sm:$0xff]
      %v1757 = vld [vmem:[%s1751 + $0x28] sm:$0xff]
      %v1758 = vld [vmem:[%s1751 + $0x30] sm:$0xff]
      %v1759 = vld [vmem:[%s1751 + $0x38] sm:$0xff]
      %v1760 = vld [vmem:[%s1751 + $0x40] sm:$0xff]
      %v1761 = vld [vmem:[%s1751 + $0x48] sm:$0xff]
      %v1762 = vld [vmem:[%s1751 + $0x50] sm:$0xff]
      %v1763 = vld [vmem:[%s1751 + $0x58] sm:$0xff]
      %v1764 = vld [vmem:[%s1751 + $0x60] sm:$0xff]
      %v1765 = vld [vmem:[%s1751 + $0x68] sm:$0xff]
      %v1766 = vld [vmem:[%s1751 + $0x70] sm:$0xff]
      %v1767 = vld [vmem:[%s1751 + $0x78] sm:$0xff]
      %1768 = vmatprep.subr.mxu0 0.0
      %1769 = vmatpush1.msra.mxu0 %v1767
      %1770 = vmatprep.subr.mxu0 0.0
      %1771 = vmatpush1.msra.mxu0 %v1766
      %1772 = vmatprep.subr.mxu0 0.0
      %1773 = vmatpush1.msra.mxu0 %v1765
      %1774 = vmatprep.subr.mxu0 0.0
      %1775 = vmatpush1.msra.mxu0 %v1764
      %1776 = vmatprep.subr.mxu0 0.0
      %1777 = vmatpush1.msra.mxu0 %v1763
      %1778 = vmatprep.subr.mxu0 0.0
      %1779 = vmatpush1.msra.mxu0 %v1762
      %1780 = vmatprep.subr.mxu0 0.0
      %1781 = vmatpush1.msra.mxu0 %v1761
      %1782 = vmatprep.subr.mxu0 0.0
      %1783 = vmatpush1.msra.mxu0 %v1760
      %1784 = vmatprep.subr.mxu0 0.0
      %1785 = vmatpush1.msra.mxu0 %v1759
      %1786 = vmatprep.subr.mxu0 0.0
      %1787 = vmatpush1.msra.mxu0 %v1758
      %1788 = vmatprep.subr.mxu0 0.0
      %1789 = vmatpush1.msra.mxu0 %v1757
      %1790 = vmatprep.subr.mxu0 0.0
      %1791 = vmatpush1.msra.mxu0 %v1756
      %1792 = vmatprep.subr.mxu0 0.0
      %1793 = vmatpush1.msra.mxu0 %v1755
      %1794 = vmatprep.subr.mxu0 0.0
      %1795 = vmatpush1.msra.mxu0 %v1754
      %1796 = vmatprep.subr.mxu0 0.0
      %1797 = vmatpush1.msra.mxu0 %v1753
      %1798 = vmatprep.subr.mxu0 0.0
      %1799 = vmatpush1.msra.mxu0 %v1752
      %1800 = vmatprep.subr.mxu0 0.0
      %1801 = vmatpush2.msra.mxu0 0.0
      %1802 = vmatprep.subr.mxu0 0.0
      %1803 = vmatpush2.msra.mxu0 0.0
      %1804 = vmatprep.subr.mxu0 0.0
      %1805 = vmatpush2.msra.mxu0 0.0
      %1806 = vmatprep.subr.mxu0 0.0
      %1807 = vmatpush2.msra.mxu0 0.0
      %1808 = vmatprep.subr.mxu0 0.0
      %1809 = vmatpush2.msra.mxu0 0.0
      %1810 = vmatprep.subr.mxu0 0.0
      %1811 = vmatpush2.msra.mxu0 0.0
      %1812 = vmatprep.subr.mxu0 0.0
      %1813 = vmatpush2.msra.mxu0 0.0
      %1814 = vmatprep.subr.mxu0 0.0
      %1815 = vmatpush2.msra.mxu0 0.0
      %1816 = vmatprep.subr.mxu0 0.0
      %1817 = vmatpush2.msra.mxu0 0.0
      %1818 = vmatprep.subr.mxu0 0.0
      %1819 = vmatpush2.msra.mxu0 0.0
      %1820 = vmatprep.subr.mxu0 0.0
      %1821 = vmatpush2.msra.mxu0 0.0
      %1822 = vmatprep.subr.mxu0 0.0
      %1823 = vmatpush2.msra.mxu0 0.0
      %1824 = vmatprep.subr.mxu0 0.0
      %1825 = vmatpush2.msra.mxu0 0.0
      %1826 = vmatprep.subr.mxu0 0.0
      %1827 = vmatpush2.msra.mxu0 0.0
      %1828 = vmatprep.subr.mxu0 0.0
      %1829 = vmatpush2.msra.mxu0 0.0
      %1830 = vmatprep.subr.mxu0 0.0
      %1831 = vmatpush2.msra.mxu0 0.0
      %1832 = vmatprep.mubr.f32.mxu0 0.0
      %1833 = vmatmul.mubr.f32.gmra.mxu0 %v1483
      %v1834 = vpop.f32.mrf.mxu0
      %v1835 = vadd.f32 0.0, %v1834
      %v1836 = vpop.f32.mrf.mxu0
      %1837 = vmatprep.mubr.f32.mxu0 0.0
      %1838 = vmatmul.mubr.f32.gmra.mxu0 %v1484
      %v1839 = vpop.f32.mrf.mxu0
      %v1840 = vadd.f32 0.0, %v1839
      %v1841 = vpop.f32.mrf.mxu0
      %1842 = vmatprep.mubr.f32.mxu0 0.0
      %1843 = vmatmul.mubr.f32.gmra.mxu0 %v1485
      %v1844 = vpop.f32.mrf.mxu0
      %v1845 = vadd.f32 0.0, %v1844
      %v1846 = vpop.f32.mrf.mxu0
      %1847 = vmatprep.mubr.f32.mxu0 0.0
      %1848 = vmatmul.mubr.f32.gmra.mxu0 %v1486
      %v1849 = vpop.f32.mrf.mxu0
      %v1850 = vadd.f32 0.0, %v1849
      %v1851 = vpop.f32.mrf.mxu0
      %1852 = vmatprep.mubr.f32.mxu0 0.0
      %1853 = vmatmul.mubr.f32.gmra.mxu0 %v1487
      %v1854 = vpop.f32.mrf.mxu0
      %v1855 = vadd.f32 0.0, %v1854
      %v1856 = vpop.f32.mrf.mxu0
      %1857 = vmatprep.mubr.f32.mxu0 0.0
      %1858 = vmatmul.mubr.f32.gmra.mxu0 %v1488
      %v1859 = vpop.f32.mrf.mxu0
      %v1860 = vadd.f32 0.0, %v1859
      %v1861 = vpop.f32.mrf.mxu0
      %1862 = vmatprep.mubr.f32.mxu0 0.0
      %1863 = vmatmul.mubr.f32.gmra.mxu0 %v1489
      %v1864 = vpop.f32.mrf.mxu0
      %v1865 = vadd.f32 0.0, %v1864
      %v1866 = vpop.f32.mrf.mxu0
      %1867 = vmatprep.mubr.f32.mxu0 0.0
      %1868 = vmatmul.mubr.f32.gmra.mxu0 %v1490
      %v1869 = vpop.f32.mrf.mxu0
      %v1870 = vadd.f32 0.0, %v1869
      %v1871 = vpop.f32.mrf.mxu0
      %1872 = vdwg.mxu0
      %v1873 = vadd.f32 %v1743, %v1835
      %v1874 = vadd.f32 %v1744, %v1840
      %v1875 = vadd.f32 %v1745, %v1845
      %v1876 = vadd.f32 %v1746, %v1850
      %v1877 = vadd.f32 %v1747, %v1855
      %v1878 = vadd.f32 %v1748, %v1860
      %v1879 = vadd.f32 %v1749, %v1865
      %v1880 = vadd.f32 %v1750, %v1870
      %v1881 = vld [vmem:[%s4] sm:$0x1]
      %v1883 = vlaneseq
      %v1884 = vshrl.u32 %v1883, 7
      %v1885 = vsub.s32 0, %v1884
      %v1886 = vrot.slane %v1881, %v1885
      %v1888 = vadd.f32 %v1873, %v1886
      %v1889 = vadd.f32 %v1874, %v1886
      %v1890 = vadd.f32 %v1875, %v1886
      %v1891 = vadd.f32 %v1876, %v1886
      %v1892 = vadd.f32 %v1877, %v1886
      %v1893 = vadd.f32 %v1878, %v1886
      %v1894 = vadd.f32 %v1879, %v1886
      %v1895 = vadd.f32 %v1880, %v1886
      %v1896 = vmax.f32 %v1888, 0.0
      %v1897 = vmax.f32 %v1889, 0.0
      %v1898 = vmax.f32 %v1890, 0.0
      %v1899 = vmax.f32 %v1891, 0.0
      %v1900 = vmax.f32 %v1892, 0.0
      %v1901 = vmax.f32 %v1893, 0.0
      %v1902 = vmax.f32 %v1894, 0.0
      %v1903 = vmax.f32 %v1895, 0.0
      %v1904 = vld [vmem:[%s5] sm:$0xff]
      %v1905 = vld [vmem:[%s5 + $0x8] sm:$0xff]
      %v1906 = vld [vmem:[%s5 + $0x10] sm:$0xff]
      %v1907 = vld [vmem:[%s5 + $0x18] sm:$0xff]
      %v1908 = vld [vmem:[%s5 + $0x20] sm:$0xff]
      %v1909 = vld [vmem:[%s5 + $0x28] sm:$0xff]
      %v1910 = vld [vmem:[%s5 + $0x30] sm:$0xff]
      %v1911 = vld [vmem:[%s5 + $0x38] sm:$0xff]
      %v1912 = vld [vmem:[%s5 + $0x40] sm:$0xff]
      %v1913 = vld [vmem:[%s5 + $0x48] sm:$0xff]
      %v1914 = vld [vmem:[%s5 + $0x50] sm:$0xff]
      %v1915 = vld [vmem:[%s5 + $0x58] sm:$0xff]
      %v1916 = vld [vmem:[%s5 + $0x60] sm:$0xff]
      %v1917 = vld [vmem:[%s5 + $0x68] sm:$0xff]
      %v1918 = vld [vmem:[%s5 + $0x70] sm:$0xff]
      %v1919 = vld [vmem:[%s5 + $0x78] sm:$0xff]
      %v1920 = vld [vmem:[%s6] sm:$0x1]
      %v1922 = vlaneseq
      %v1923 = vshrl.u32 %v1922, 7
      %v1924 = vsub.s32 0, %v1923
      %v1925 = vrot.slane %v1920, %v1924
      %1927 = vmatprep.subr.mxu0 0.0
      %1928 = vmatpush1.msra.mxu0 %v1919
      %1929 = vmatprep.subr.mxu0 0.0
      %1930 = vmatpush1.msra.mxu0 %v1918
      %1931 = vmatprep.subr.mxu0 0.0
      %1932 = vmatpush1.msra.mxu0 %v1917
      %1933 = vmatprep.subr.mxu0 0.0
      %1934 = vmatpush1.msra.mxu0 %v1916
      %1935 = vmatprep.subr.mxu0 0.0
      %1936 = vmatpush1.msra.mxu0 %v1915
      %1937 = vmatprep.subr.mxu0 0.0
      %1938 = vmatpush1.msra.mxu0 %v1914
      %1939 = vmatprep.subr.mxu0 0.0
      %1940 = vmatpush1.msra.mxu0 %v1913
      %1941 = vmatprep.subr.mxu0 0.0
      %1942 = vmatpush1.msra.mxu0 %v1912
      %1943 = vmatprep.subr.mxu0 0.0
      %1944 = vmatpush1.msra.mxu0 %v1911
      %1945 = vmatprep.subr.mxu0 0.0
      %1946 = vmatpush1.msra.mxu0 %v1910
      %1947 = vmatprep.subr.mxu0 0.0
      %1948 = vmatpush1.msra.mxu0 %v1909
      %1949 = vmatprep.subr.mxu0 0.0
      %1950 = vmatpush1.msra.mxu0 %v1908
      %1951 = vmatprep.subr.mxu0 0.0
      %1952 = vmatpush1.msra.mxu0 %v1907
      %1953 = vmatprep.subr.mxu0 0.0
      %1954 = vmatpush1.msra.mxu0 %v1906
      %1955 = vmatprep.subr.mxu0 0.0
      %1956 = vmatpush1.msra.mxu0 %v1905
      %1957 = vmatprep.subr.mxu0 0.0
      %1958 = vmatpush1.msra.mxu0 %v1904
      %1959 = vmatprep.subr.mxu0 0.0
      %1960 = vmatpush2.msra.mxu0 0.0
      %1961 = vmatprep.subr.mxu0 0.0
      %1962 = vmatpush2.msra.mxu0 0.0
      %1963 = vmatprep.subr.mxu0 0.0
      %1964 = vmatpush2.msra.mxu0 0.0
      %1965 = vmatprep.subr.mxu0 0.0
      %1966 = vmatpush2.msra.mxu0 0.0
      %1967 = vmatprep.subr.mxu0 0.0
      %1968 = vmatpush2.msra.mxu0 0.0
      %1969 = vmatprep.subr.mxu0 0.0
      %1970 = vmatpush2.msra.mxu0 0.0
      %1971 = vmatprep.subr.mxu0 0.0
      %1972 = vmatpush2.msra.mxu0 0.0
      %1973 = vmatprep.subr.mxu0 0.0
      %1974 = vmatpush2.msra.mxu0 0.0
      %1975 = vmatprep.subr.mxu0 0.0
      %1976 = vmatpush2.msra.mxu0 0.0
      %1977 = vmatprep.subr.mxu0 0.0
      %1978 = vmatpush2.msra.mxu0 0.0
      %1979 = vmatprep.subr.mxu0 0.0
      %1980 = vmatpush2.msra.mxu0 0.0
      %1981 = vmatprep.subr.mxu0 0.0
      %1982 = vmatpush2.msra.mxu0 0.0
      %1983 = vmatprep.subr.mxu0 0.0
      %1984 = vmatpush2.msra.mxu0 0.0
      %1985 = vmatprep.subr.mxu0 0.0
      %1986 = vmatpush2.msra.mxu0 0.0
      %1987 = vmatprep.subr.mxu0 0.0
      %1988 = vmatpush2.msra.mxu0 0.0
      %1989 = vmatprep.subr.mxu0 0.0
      %1990 = vmatpush2.msra.mxu0 0.0
      %1991 = vmatprep.mubr.f32.mxu0 0.0
      %1992 = vmatmul.mubr.f32.gmra.mxu0 %v1896
      %v1993 = vpop.f32.mrf.mxu0
      %v1994 = vadd.f32 %v1925, %v1993
      %v1995 = vpop.f32.mrf.mxu0
      %1996 = vmatprep.mubr.f32.mxu0 0.0
      %1997 = vmatmul.mubr.f32.gmra.mxu0 %v1897
      %v1998 = vpop.f32.mrf.mxu0
      %v1999 = vadd.f32 %v1925, %v1998
      %v2000 = vpop.f32.mrf.mxu0
      %2001 = vmatprep.mubr.f32.mxu0 0.0
      %2002 = vmatmul.mubr.f32.gmra.mxu0 %v1898
      %v2003 = vpop.f32.mrf.mxu0
      %v2004 = vadd.f32 %v1925, %v2003
      %v2005 = vpop.f32.mrf.mxu0
      %2006 = vmatprep.mubr.f32.mxu0 0.0
      %2007 = vmatmul.mubr.f32.gmra.mxu0 %v1899
      %v2008 = vpop.f32.mrf.mxu0
      %v2009 = vadd.f32 %v1925, %v2008
      %v2010 = vpop.f32.mrf.mxu0
      %2011 = vmatprep.mubr.f32.mxu0 0.0
      %2012 = vmatmul.mubr.f32.gmra.mxu0 %v1900
      %v2013 = vpop.f32.mrf.mxu0
      %v2014 = vadd.f32 %v1925, %v2013
      %v2015 = vpop.f32.mrf.mxu0
      %2016 = vmatprep.mubr.f32.mxu0 0.0
      %2017 = vmatmul.mubr.f32.gmra.mxu0 %v1901
      %v2018 = vpop.f32.mrf.mxu0
      %v2019 = vadd.f32 %v1925, %v2018
      %v2020 = vpop.f32.mrf.mxu0
      %2021 = vmatprep.mubr.f32.mxu0 0.0
      %2022 = vmatmul.mubr.f32.gmra.mxu0 %v1902
      %v2023 = vpop.f32.mrf.mxu0
      %v2024 = vadd.f32 %v1925, %v2023
      %v2025 = vpop.f32.mrf.mxu0
      %2026 = vmatprep.mubr.f32.mxu0 0.0
      %2027 = vmatmul.mubr.f32.gmra.mxu0 %v1903
      %v2028 = vpop.f32.mrf.mxu0
      %v2029 = vadd.f32 %v1925, %v2028
      %v2030 = vpop.f32.mrf.mxu0
      %2031 = vdwg.mxu0
      %v2032 = vadd.f32 %v1994, %v309
      %v2033 = vadd.f32 %v1999, %v310
      %v2034 = vadd.f32 %v2004, %v311
      %v2035 = vadd.f32 %v2009, %v312
      %v2036 = vadd.f32 %v2014, %v313
      %v2037 = vadd.f32 %v2019, %v314
      %v2038 = vadd.f32 %v2024, %v315
      %v2039 = vadd.f32 %v2029, %v316
      %v2040 = vmax.f32 %v2032, 0.0
      %v2041 = vmax.f32 %v2033, 0.0
      %v2042 = vmax.f32 %v2034, 0.0
      %v2043 = vmax.f32 %v2035, 0.0
      %v2044 = vmax.f32 %v2036, 0.0
      %v2045 = vmax.f32 %v2037, 0.0
      %v2046 = vmax.f32 %v2038, 0.0
      %v2047 = vmax.f32 %v2039, 0.0
      %2048 = vst [vmem:[%s302] sm:$0xff] %v2040
      %2049 = vst [vmem:[%s302 + $0x8] sm:$0xff] %v2041
      %2050 = vst [vmem:[%s302 + $0x10] sm:$0xff] %v2042
      %2051 = vst [vmem:[%s302 + $0x18] sm:$0xff] %v2043
      %2052 = vst [vmem:[%s302 + $0x20] sm:$0xff] %v2044
      %2053 = vst [vmem:[%s302 + $0x28] sm:$0xff] %v2045
      %2054 = vst [vmem:[%s302 + $0x30] sm:$0xff] %v2046
      %2055 = vst [vmem:[%s302 + $0x38] sm:$0xff] %v2047
      %s2056 = smul.u32 4, %s23
      %p2057 = scmp.lt.s32.totalorder %s22, 1
      %s2058 = scalar_select %p2057, %s22, 1
      %p2059 = scmp.lt.s32.totalorder %s2056, 15
      %s2060 = scalar_select %p2059, %s2056, 15
      %s2061 = smul.addr %s2060, 2
      %s2062 = smul.addr %s2058, 32
      %s2063 = sadd.s32 %s2061, %s2062
      %s2064 = smul.addr %s2063, 8
      %s2065 = scalar_lea.vmem %s7, %s2064
      // Predicated region
      $region49: #{bottleneck_forward.1} parent=47 // pred_check
        %p2066 = pneg %p202
      $region50: #{bottleneck_forward.1} parent=47 // pred_check_branch
        %2068 = sbr.rel (%p2066) target = $region52
      $region51: #{bottleneck_forward.1} parent=47 // pred_region
        %s2069 = smul.u32 4, %s23
      $region52: #{bottleneck_forward.1} parent=47 // pred_fallthru
        _
    $region48: #{bottleneck_forward.1} parent=5 // pred_fallthru
      _
    %p2070 = scmp.le.s32.totalorder 2, %s13
    // Predicated region
    $region53: #{bottleneck_forward.1} parent=5 // pred_check
      %p2071 = pneg %p2070
    $region54: #{bottleneck_forward.1} parent=5 // pred_check_branch
      %2073 = sbr.rel (%p2071) target = $region56
    $region55: #{bottleneck_forward.1} parent=5 // pred_region
      %s2074 = ssub.s32 %s13, 2
      // Predicated region
      $region57: #{bottleneck_forward.1} parent=55 // pred_check
        %p2075 = pneg %p208
      $region58: #{bottleneck_forward.1} parent=55 // pred_check_branch
        %2077 = sbr.rel (%p2075) target = $region60
      $region59: #{bottleneck_forward.1} parent=55 // pred_region
        %s2078 = smul.u32 4, %s25
        %p2079 = scmp.lt.s32.totalorder %s24, 1
        %s2080 = scalar_select %p2079, %s24, 1
        %p2081 = scmp.lt.s32.totalorder %s2078, 15
        %s2082 = scalar_select %p2081, %s2078, 15
        %s2083 = smul.addr %s2082, 2
        %s2084 = smul.addr %s2080, 32
        %s2085 = sadd.s32 %s2083, %s2084
        %s2086 = smul.addr %s2085, 8
        %s2087 = scalar_lea.vmem %s7, %s2086
      $region60: #{bottleneck_forward.1} parent=55 // pred_fallthru
        _
    $region56: #{bottleneck_forward.1} parent=5 // pred_fallthru
      _
  $region6: #{bottleneck_forward.1} parent=0 // loop_footer
    %s17 = sadd.s32 1, %s13
  $region7: #{bottleneck_forward.1} parent=0 // loop_footer_branch
    %12 = sbr.rel target = $region3
  $region8: #{bottleneck_forward.1} parent=0 // loop_exit
    _

</llo_original>
